<compile_context>
chip_gen: v5e
topology: v5e:2x2
jax: 0.10.0
libtpu: 0.0.40
codegen_flags: <defaults>
</compile_context>

<pallas_src>
import functools

import jax
import jax.numpy as jnp
from jax.experimental import pallas as pl
from jax.experimental.pallas import tpu as pltpu


def _midscope_kernel(x_ref, w1_ref, w2_ref, p_ref, o_ref,
                     pad1_ref, pad2_ref, *, H, W, Cin, Cout):
    """Fused: conv(3x3,d=1)+bias+ReLU+BN -> conv(3x3,d=2)+bias+ReLU+BN.

    x_ref    : (1, H, W*Cin)        lane-dense input tile (one batch element)
    w1_ref   : (3, W*Cin, W*Cout)   stage-1 block-diag weights (one per kh)
    w2_ref   : (3, W*Cout, W*Cout)  stage-2 block-diag weights (one per kh)
    p_ref    : (6, W*Cout)          [b1, s1, t1, b2, s2, t2], pre-tiled over W
    o_ref    : (1, H, W*Cout)       lane-dense output
    pad1_ref : (H+2, W*Cin)         VMEM scratch, row-padded stage-1 input
    pad2_ref : (H+4, W*Cout)        VMEM scratch, row-padded stage-1 output
    """
    f32 = jnp.float32
    WCin = W * Cin
    WCout = W * Cout
    hi = jax.lax.Precision.HIGHEST

    p = p_ref[...]                                   # (6, W*Cout)

    # ---- stage 1: 'same' 3x3 conv (dilation 1) + bias + ReLU + BN --------
    # Halo-only zeroing: just the two extra rows (column padding is folded
    # into the block-diagonal weights); the interior is fully overwritten.
    zrow1 = jnp.zeros((1, WCin), f32)
    pad1_ref[pl.ds(0, 1), :] = zrow1
    pad1_ref[pl.ds(H + 1, 1), :] = zrow1
    pad1_ref[pl.ds(1, H), :] = x_ref[0]

    # Three matmuls, LHS = plain sublane slices (no concat / roll / relayout).
    y1 = (jnp.dot(pad1_ref[pl.ds(0, H), :], w1_ref[0],
                  preferred_element_type=f32, precision=hi)
          + jnp.dot(pad1_ref[pl.ds(1, H), :], w1_ref[1],
                    preferred_element_type=f32, precision=hi)
          + jnp.dot(pad1_ref[pl.ds(2, H), :], w1_ref[2],
                    preferred_element_type=f32, precision=hi))
    y1 = jnp.maximum(y1 + p[0:1], 0.0) * p[1:2] + p[2:3]   # bias+ReLU+BN

    # ---- stage 2: 'same' 3x3 conv (dilation 2) + bias + ReLU + BN --------
    zrow2 = jnp.zeros((2, WCout), f32)
    pad2_ref[pl.ds(0, 2), :] = zrow2
    pad2_ref[pl.ds(H + 2, 2), :] = zrow2
    pad2_ref[pl.ds(2, H), :] = y1          # stage-1 activation stays in VMEM

    y2 = (jnp.dot(pad2_ref[pl.ds(0, H), :], w2_ref[0],
                  preferred_element_type=f32, precision=hi)
          + jnp.dot(pad2_ref[pl.ds(2, H), :], w2_ref[1],
                    preferred_element_type=f32, precision=hi)
          + jnp.dot(pad2_ref[pl.ds(4, H), :], w2_ref[2],
                    preferred_element_type=f32, precision=hi))
    y2 = jnp.maximum(y2 + p[3:4], 0.0) * p[4:5] + p[5:6]

    # Lane-dense unmasked store: minor dim = W*Cout (= 128 at the test shape).
    o_ref[0] = y2.astype(o_ref.dtype)


def _fold_conv_to_blockdiag(w_hwio, Wsp, dilation):
    """Fold the kw taps + 'same' column zero-padding into per-kh matrices.

    w_hwio: (3, 3, Cin, Cout).  Returns (3, Wsp*Cin, Wsp*Cout) where matrix kh
    maps one lane-dense input row (Wsp*Cin,) to one lane-dense output row:
        out[w*Cout+co] = sum_{kw,ci} in[(w + kw*d - d)*Cin + ci] * w[kh,kw,ci,co]
    with out-of-range source columns dropped (== zero 'same' padding).
    """
    kh_n, kw_n, _, _ = w_hwio.shape
    pad = dilation                      # (k-1)//2 * dilation for k=3
    mats = []
    for kh in range(kh_n):
        m = None
        for kw in range(kw_n):
            shift = kw * dilation - pad            # src col = w + shift
            sel = jnp.eye(Wsp, Wsp, k=-shift, dtype=w_hwio.dtype)
            term = jnp.kron(sel, w_hwio[kh, kw])   # (Wsp*Cin, Wsp*Cout)
            m = term if m is None else m + term
        mats.append(m)
    return jnp.stack(mats)


def midscope_conv(x, params, eps=1e-5):
    """MidScope_Conv forward. x: (N, H, W, Cin) NHWC float32."""
    N, H, W, Cin = x.shape
    Cout = params["w1"].shape[-1]
    WCin, WCout = W * Cin, W * Cout

    # Fold HWIO conv weights (+ column 'same' padding) into block-diag mats.
    w1 = _fold_conv_to_blockdiag(params["w1"], W, dilation=1)  # (3, WCin, WCout)
    w2 = _fold_conv_to_blockdiag(params["w2"], W, dilation=2)  # (3, WCout, WCout)

    # Fold BN running stats into per-channel scale/shift (inference mode),
    # pre-tile everything to lane-dense (W*Cout,) rows and pack into one array.
    s1 = params["gamma1"] / jnp.sqrt(params["var1"] + eps)
    t1 = params["beta1"] - params["mean1"] * s1
    s2 = params["gamma2"] / jnp.sqrt(params["var2"] + eps)
    t2 = params["beta2"] - params["mean2"] * s2
    pvec = jnp.stack([jnp.tile(v, W) for v in
                      (params["b1"], s1, t1, params["b2"], s2, t2)])  # (6, WCout)

    x_ld = x.reshape(N, H, WCin)       # lane-dense activations (free reshape)

    kern = functools.partial(_midscope_kernel, H=H, W=W, Cin=Cin, Cout=Cout)

    flops = 2 * N * 3 * H * (WCin * WCout + WCout * WCout)
    bytes_accessed = 4 * (N * H * (WCin + WCout)
                          + 3 * WCin * WCout + 3 * WCout * WCout + 6 * WCout)

    out = pl.pallas_call(
        kern,
        out_shape=jax.ShapeDtypeStruct((N, H, WCout), jnp.float32),
        grid=(N,),
        in_specs=[
            pl.BlockSpec((1, H, WCin), lambda n: (n, 0, 0)),
            pl.BlockSpec((3, WCin, WCout), lambda n: (0, 0, 0)),
            pl.BlockSpec((3, WCout, WCout), lambda n: (0, 0, 0)),
            pl.BlockSpec((6, WCout), lambda n: (0, 0)),
        ],
        out_specs=pl.BlockSpec((1, H, WCout), lambda n: (n, 0, 0)),
        scratch_shapes=[
            pltpu.VMEM((H + 2, WCin), jnp.float32),
            pltpu.VMEM((H + 4, WCout), jnp.float32),
        ],
        compiler_params=pltpu.CompilerParams(
            dimension_semantics=("parallel",)),
        cost_estimate=pl.CostEstimate(
            flops=flops, transcendentals=0, bytes_accessed=bytes_accessed),
    )(x_ld, w1, w2, pvec)

    # Free reshape of the minor dim back to NHWC.
    return out.reshape(N, H, W, Cout)


def _reference(x, params, eps=1e-5):
    """Pure-JAX reference (lax conv) for correctness check."""
    def block(h, w, b, g, bt, m, v, d):
        y = jax.lax.conv_general_dilated(
            h, w, window_strides=(1, 1), padding="SAME",
            rhs_dilation=(d, d),
            dimension_numbers=("NHWC", "HWIO", "NHWC"),
            precision=jax.lax.Precision.HIGHEST)
        y = y + b
        y = jnp.maximum(y, 0.0)
        return g * (y - m) / jnp.sqrt(v + eps) + bt
    y = block(x, params["w1"], params["b1"], params["gamma1"], params["beta1"],
              params["mean1"], params["var1"], 1)
    y = block(y, params["w2"], params["b2"], params["gamma2"], params["beta2"],
              params["mean2"], params["var2"], 2)
    return y


def make_params(key, in_channels, out_channels):
    ks = jax.random.split(key, 10)
    return {
        # conv1: in_channels -> out_channels, k=3 (HWIO)
        "w1": 0.1 * jax.random.normal(ks[0], (3, 3, in_channels, out_channels),
                                      jnp.float32),
        "b1": 0.1 * jax.random.normal(ks[1], (out_channels,), jnp.float32),
        "gamma1": 1.0 + 0.1 * jax.random.normal(ks[2], (out_channels,), jnp.float32),
        "beta1": 0.1 * jax.random.normal(ks[3], (out_channels,), jnp.float32),
        "mean1": 0.05 * jax.random.normal(ks[4], (out_channels,), jnp.float32),
        "var1": 1.0 + 0.1 * jax.random.uniform(ks[5], (out_channels,), jnp.float32),
        # conv2: out_channels -> out_channels, k=3, dilation=2 (HWIO)
        "w2": 0.1 * jax.random.normal(ks[6], (3, 3, out_channels, out_channels),
                                      jnp.float32),
        "b2": 0.1 * jax.random.normal(ks[7], (out_channels,), jnp.float32),
        "gamma2": 1.0 + 0.1 * jax.random.normal(ks[8], (out_channels,), jnp.float32),
        "beta2": 0.1 * jax.random.normal(ks[9], (out_channels,), jnp.float32),
        "mean2": jnp.linspace(-0.05, 0.05, out_channels, dtype=jnp.float32),
        "var2": jnp.linspace(0.9, 1.1, out_channels, dtype=jnp.float32),
    }


if __name__ == "__main__":
    key = jax.random.PRNGKey(0)
    k_x, k_p = jax.random.split(key)

    N, H, W = 2, 16, 16
    in_channels, out_channels = 4, 8

    # NHWC input (equivalent to PyTorch NCHW (2, 4, 16, 16) transposed).
    x = jax.random.normal(k_x, (N, H, W, in_channels), jnp.float32)
    params = make_params(k_p, in_channels, out_channels)

    out = jax.block_until_ready(midscope_conv(x, params))
    ref = _reference(x, params)

    assert out.shape == (N, H, W, out_channels)
    assert jnp.allclose(out, ref, atol=2e-4, rtol=2e-4), "mismatch vs reference"

    print("KERNEL_OK")
</pallas_src>

<mosaic_0001>
module attributes {stable_mosaic.version = 11 : i64} {
  func.func @_midscope_kernel(%arg0: i32, %arg1: memref<1x16x64xf32, #tpu.memory_space<vmem>>, %arg2: memref<3x64x128xf32, #tpu.memory_space<vmem>>, %arg3: memref<3x128x128xf32, #tpu.memory_space<vmem>>, %arg4: memref<6x128xf32, #tpu.memory_space<vmem>>, %arg5: memref<1x16x128xf32, #tpu.memory_space<vmem>>, %arg6: memref<18x64xf32, #tpu.memory_space<vmem>>, %arg7: memref<20x128xf32, #tpu.memory_space<vmem>>) attributes {dimension_semantics = [#tpu.dimension_semantics<parallel>], iteration_bounds = array<i64: 2>, scalar_prefetch = 0 : i64, scratch_operands = 2 : i64, tpu.core_type = #tpu.core_type<tc>, window_params = [{transform_indices = @transform_0, window_bounds = array<i64: 1, 16, 64>}, {pipeline_mode = #tpu.pipeline_mode<synchronous>, transform_indices = @transform_1, window_bounds = array<i64: 3, 64, 128>}, {pipeline_mode = #tpu.pipeline_mode<synchronous>, transform_indices = @transform_2, window_bounds = array<i64: 3, 128, 128>}, {pipeline_mode = #tpu.pipeline_mode<synchronous>, transform_indices = @transform_3, window_bounds = array<i64: 6, 128>}, {transform_indices = @transform_4, window_bounds = array<i64: 1, 16, 128>}]} {
    %c0 = arith.constant 0 : index
    %c0_0 = arith.constant 0 : index
    %0 = vector.load %arg4[%c0, %c0_0] : memref<6x128xf32, #tpu.memory_space<vmem>>, vector<6x128xf32>
    %cst = arith.constant 0.000000e+00 : f32
    %1 = vector.broadcast %cst : f32 to vector<1x64xf32>
    %c0_1 = arith.constant 0 : index
    %c0_2 = arith.constant 0 : index
    %2 = vector.load %arg6[%c0_1, %c0_2] : memref<18x64xf32, #tpu.memory_space<vmem>>, vector<1x64xf32>
    tpu.vector_store %arg6[%c0_1, %c0_2], %1 {strides = array<i32>} : memref<18x64xf32, #tpu.memory_space<vmem>>, vector<1x64xf32>,
    %c17 = arith.constant 17 : index
    %c0_3 = arith.constant 0 : index
    %3 = vector.load %arg6[%c17, %c0_3] : memref<18x64xf32, #tpu.memory_space<vmem>>, vector<1x64xf32>
    tpu.vector_store %arg6[%c17, %c0_3], %1 {strides = array<i32>} : memref<18x64xf32, #tpu.memory_space<vmem>>, vector<1x64xf32>,
    %c0_4 = arith.constant 0 : index
    %c0_5 = arith.constant 0 : index
    %c0_6 = arith.constant 0 : index
    %4 = vector.load %arg1[%c0_4, %c0_5, %c0_6] : memref<1x16x64xf32, #tpu.memory_space<vmem>>, vector<1x16x64xf32>
    %5 = vector.shape_cast %4 : vector<1x16x64xf32> to vector<16x64xf32>
    %c1 = arith.constant 1 : index
    %c0_7 = arith.constant 0 : index
    %6 = vector.load %arg6[%c1, %c0_7] : memref<18x64xf32, #tpu.memory_space<vmem>>, vector<16x64xf32>
    tpu.vector_store %arg6[%c1, %c0_7], %5 {strides = array<i32>} : memref<18x64xf32, #tpu.memory_space<vmem>>, vector<16x64xf32>,
    %c0_8 = arith.constant 0 : index
    %c0_9 = arith.constant 0 : index
    %7 = vector.load %arg6[%c0_8, %c0_9] : memref<18x64xf32, #tpu.memory_space<vmem>>, vector<16x64xf32>
    %c0_10 = arith.constant 0 : index
    %c0_11 = arith.constant 0 : index
    %c0_12 = arith.constant 0 : index
    %8 = vector.load %arg2[%c0_10, %c0_11, %c0_12] : memref<3x64x128xf32, #tpu.memory_space<vmem>>, vector<1x64x128xf32>
    %9 = vector.shape_cast %8 : vector<1x64x128xf32> to vector<64x128xf32>
    %cst_13 = arith.constant dense<0.000000e+00> : vector<16x128xf32>
    %10 = tpu.matmul %7, %9, %cst_13 {dimension_numbers = #tpu.dot_dimension_numbers<[1], [0], [0], [1], [0, 0, 1, 1], [], []>, precision = #tpu.contract_precision<fp32>} : vector<16x64xf32>, vector<64x128xf32>, vector<16x128xf32> -> vector<16x128xf32>
    %c1_14 = arith.constant 1 : index
    %c0_15 = arith.constant 0 : index
    %11 = vector.load %arg6[%c1_14, %c0_15] : memref<18x64xf32, #tpu.memory_space<vmem>>, vector<16x64xf32>
    %c1_16 = arith.constant 1 : index
    %c0_17 = arith.constant 0 : index
    %c0_18 = arith.constant 0 : index
    %12 = vector.load %arg2[%c1_16, %c0_17, %c0_18] : memref<3x64x128xf32, #tpu.memory_space<vmem>>, vector<1x64x128xf32>
    %13 = vector.shape_cast %12 : vector<1x64x128xf32> to vector<64x128xf32>
    %cst_19 = arith.constant dense<0.000000e+00> : vector<16x128xf32>
    %14 = tpu.matmul %11, %13, %cst_19 {dimension_numbers = #tpu.dot_dimension_numbers<[1], [0], [0], [1], [0, 0, 1, 1], [], []>, precision = #tpu.contract_precision<fp32>} : vector<16x64xf32>, vector<64x128xf32>, vector<16x128xf32> -> vector<16x128xf32>
    %15 = arith.addf %10, %14 : vector<16x128xf32>
    %c2 = arith.constant 2 : index
    %c0_20 = arith.constant 0 : index
    %16 = vector.load %arg6[%c2, %c0_20] : memref<18x64xf32, #tpu.memory_space<vmem>>, vector<16x64xf32>
    %c2_21 = arith.constant 2 : index
    %c0_22 = arith.constant 0 : index
    %c0_23 = arith.constant 0 : index
    %17 = vector.load %arg2[%c2_21, %c0_22, %c0_23] : memref<3x64x128xf32, #tpu.memory_space<vmem>>, vector<1x64x128xf32>
    %18 = vector.shape_cast %17 : vector<1x64x128xf32> to vector<64x128xf32>
    %cst_24 = arith.constant dense<0.000000e+00> : vector<16x128xf32>
    %19 = tpu.matmul %16, %18, %cst_24 {dimension_numbers = #tpu.dot_dimension_numbers<[1], [0], [0], [1], [0, 0, 1, 1], [], []>, precision = #tpu.contract_precision<fp32>} : vector<16x64xf32>, vector<64x128xf32>, vector<16x128xf32> -> vector<16x128xf32>
    %20 = arith.addf %15, %19 : vector<16x128xf32>
    %21 = vector.extract_strided_slice %0 {offsets = [0, 0], sizes = [1, 128], strides = [1, 1]} : vector<6x128xf32> to vector<1x128xf32>
    %22 = vector.broadcast %21 : vector<1x128xf32> to vector<16x128xf32>
    %23 = arith.addf %20, %22 : vector<16x128xf32>
    %cst_25 = arith.constant 0.000000e+00 : f32
    %24 = vector.broadcast %cst_25 : f32 to vector<16x128xf32>
    %25 = arith.maximumf %23, %24 : vector<16x128xf32>
    %26 = vector.extract_strided_slice %0 {offsets = [1, 0], sizes = [1, 128], strides = [1, 1]} : vector<6x128xf32> to vector<1x128xf32>
    %27 = vector.broadcast %26 : vector<1x128xf32> to vector<16x128xf32>
    %28 = arith.mulf %25, %27 : vector<16x128xf32>
    %29 = vector.extract_strided_slice %0 {offsets = [2, 0], sizes = [1, 128], strides = [1, 1]} : vector<6x128xf32> to vector<1x128xf32>
    %30 = vector.broadcast %29 : vector<1x128xf32> to vector<16x128xf32>
    %31 = arith.addf %28, %30 : vector<16x128xf32>
    %cst_26 = arith.constant 0.000000e+00 : f32
    %32 = vector.broadcast %cst_26 : f32 to vector<2x128xf32>
    %c0_27 = arith.constant 0 : index
    %c0_28 = arith.constant 0 : index
    %33 = vector.load %arg7[%c0_27, %c0_28] : memref<20x128xf32, #tpu.memory_space<vmem>>, vector<2x128xf32>
    tpu.vector_store %arg7[%c0_27, %c0_28], %32 {strides = array<i32>} : memref<20x128xf32, #tpu.memory_space<vmem>>, vector<2x128xf32>,
    %c18 = arith.constant 18 : index
    %c0_29 = arith.constant 0 : index
    %34 = vector.load %arg7[%c18, %c0_29] : memref<20x128xf32, #tpu.memory_space<vmem>>, vector<2x128xf32>
    tpu.vector_store %arg7[%c18, %c0_29], %32 {strides = array<i32>} : memref<20x128xf32, #tpu.memory_space<vmem>>, vector<2x128xf32>,
    %c2_30 = arith.constant 2 : index
    %c0_31 = arith.constant 0 : index
    %35 = vector.load %arg7[%c2_30, %c0_31] : memref<20x128xf32, #tpu.memory_space<vmem>>, vector<16x128xf32>
    tpu.vector_store %arg7[%c2_30, %c0_31], %31 {strides = array<i32>} : memref<20x128xf32, #tpu.memory_space<vmem>>, vector<16x128xf32>,
    %c0_32 = arith.constant 0 : index
    %c0_33 = arith.constant 0 : index
    %36 = vector.load %arg7[%c0_32, %c0_33] : memref<20x128xf32, #tpu.memory_space<vmem>>, vector<16x128xf32>
    %c0_34 = arith.constant 0 : index
    %c0_35 = arith.constant 0 : index
    %c0_36 = arith.constant 0 : index
    %37 = vector.load %arg3[%c0_34, %c0_35, %c0_36] : memref<3x128x128xf32, #tpu.memory_space<vmem>>, vector<1x128x128xf32>
    %38 = vector.shape_cast %37 : vector<1x128x128xf32> to vector<128x128xf32>
    %cst_37 = arith.constant dense<0.000000e+00> : vector<16x128xf32>
    %39 = tpu.matmul %36, %38, %cst_37 {dimension_numbers = #tpu.dot_dimension_numbers<[1], [0], [0], [1], [0, 0, 1, 1], [], []>, precision = #tpu.contract_precision<fp32>} : vector<16x128xf32>, vector<128x128xf32>, vector<16x128xf32> -> vector<16x128xf32>
    %c2_38 = arith.constant 2 : index
    %c0_39 = arith.constant 0 : index
    %40 = vector.load %arg7[%c2_38, %c0_39] : memref<20x128xf32, #tpu.memory_space<vmem>>, vector<16x128xf32>
    %c1_40 = arith.constant 1 : index
    %c0_41 = arith.constant 0 : index
    %c0_42 = arith.constant 0 : index
    %41 = vector.load %arg3[%c1_40, %c0_41, %c0_42] : memref<3x128x128xf32, #tpu.memory_space<vmem>>, vector<1x128x128xf32>
    %42 = vector.shape_cast %41 : vector<1x128x128xf32> to vector<128x128xf32>
    %cst_43 = arith.constant dense<0.000000e+00> : vector<16x128xf32>
    %43 = tpu.matmul %40, %42, %cst_43 {dimension_numbers = #tpu.dot_dimension_numbers<[1], [0], [0], [1], [0, 0, 1, 1], [], []>, precision = #tpu.contract_precision<fp32>} : vector<16x128xf32>, vector<128x128xf32>, vector<16x128xf32> -> vector<16x128xf32>
    %44 = arith.addf %39, %43 : vector<16x128xf32>
    %c4 = arith.constant 4 : index
    %c0_44 = arith.constant 0 : index
    %45 = vector.load %arg7[%c4, %c0_44] : memref<20x128xf32, #tpu.memory_space<vmem>>, vector<16x128xf32>
    %c2_45 = arith.constant 2 : index
    %c0_46 = arith.constant 0 : index
    %c0_47 = arith.constant 0 : index
    %46 = vector.load %arg3[%c2_45, %c0_46, %c0_47] : memref<3x128x128xf32, #tpu.memory_space<vmem>>, vector<1x128x128xf32>
    %47 = vector.shape_cast %46 : vector<1x128x128xf32> to vector<128x128xf32>
    %cst_48 = arith.constant dense<0.000000e+00> : vector<16x128xf32>
    %48 = tpu.matmul %45, %47, %cst_48 {dimension_numbers = #tpu.dot_dimension_numbers<[1], [0], [0], [1], [0, 0, 1, 1], [], []>, precision = #tpu.contract_precision<fp32>} : vector<16x128xf32>, vector<128x128xf32>, vector<16x128xf32> -> vector<16x128xf32>
    %49 = arith.addf %44, %48 : vector<16x128xf32>
    %50 = vector.extract_strided_slice %0 {offsets = [3, 0], sizes = [1, 128], strides = [1, 1]} : vector<6x128xf32> to vector<1x128xf32>
    %51 = vector.broadcast %50 : vector<1x128xf32> to vector<16x128xf32>
    %52 = arith.addf %49, %51 : vector<16x128xf32>
    %cst_49 = arith.constant 0.000000e+00 : f32
    %53 = vector.broadcast %cst_49 : f32 to vector<16x128xf32>
    %54 = arith.maximumf %52, %53 : vector<16x128xf32>
    %55 = vector.extract_strided_slice %0 {offsets = [4, 0], sizes = [1, 128], strides = [1, 1]} : vector<6x128xf32> to vector<1x128xf32>
    %56 = vector.broadcast %55 : vector<1x128xf32> to vector<16x128xf32>
    %57 = arith.mulf %54, %56 : vector<16x128xf32>
    %58 = vector.extract_strided_slice %0 {offsets = [5, 0], sizes = [1, 128], strides = [1, 1]} : vector<6x128xf32> to vector<1x128xf32>
    %59 = vector.broadcast %58 : vector<1x128xf32> to vector<16x128xf32>
    %60 = arith.addf %57, %59 : vector<16x128xf32>
    %c0_50 = arith.constant 0 : index
    %c0_51 = arith.constant 0 : index
    %c0_52 = arith.constant 0 : index
    %61 = vector.load %arg5[%c0_50, %c0_51, %c0_52] : memref<1x16x128xf32, #tpu.memory_space<vmem>>, vector<1x16x128xf32>
    %62 = vector.shape_cast %61 : vector<1x16x128xf32> to vector<16x128xf32>
    %63 = vector.shape_cast %60 : vector<16x128xf32> to vector<1x16x128xf32>
    tpu.vector_store %arg5[%c0_50, %c0_51, %c0_52], %63 {strides = array<i32>} : memref<1x16x128xf32, #tpu.memory_space<vmem>>, vector<1x16x128xf32>,
    return
  }
  func.func @transform_0(%arg0: i32) -> (i32, i32, i32) {
    %c0_i32 = arith.constant 0 : i32
    %c0_i32_0 = arith.constant 0 : i32
    %c0_i32_1 = arith.constant 0 : i32
    return %arg0, %c0_i32, %c0_i32_0 : i32, i32, i32
  }
  func.func @transform_1(%arg0: i32) -> (i32, i32, i32) {
    %c0_i32 = arith.constant 0 : i32
    %c0_i32_0 = arith.constant 0 : i32
    %c0_i32_1 = arith.constant 0 : i32
    %c0_i32_2 = arith.constant 0 : i32
    return %c0_i32, %c0_i32_0, %c0_i32_1 : i32, i32, i32
  }
  func.func @transform_2(%arg0: i32) -> (i32, i32, i32) {
    %c0_i32 = arith.constant 0 : i32
    %c0_i32_0 = arith.constant 0 : i32
    %c0_i32_1 = arith.constant 0 : i32
    %c0_i32_2 = arith.constant 0 : i32
    return %c0_i32, %c0_i32_0, %c0_i32_1 : i32, i32, i32
  }
  func.func @transform_3(%arg0: i32) -> (i32, i32) {
    %c0_i32 = arith.constant 0 : i32
    %c0_i32_0 = arith.constant 0 : i32
    %c0_i32_1 = arith.constant 0 : i32
    return %c0_i32, %c0_i32_0 : i32, i32
  }
  func.func @transform_4(%arg0: i32) -> (i32, i32, i32) {
    %c0_i32 = arith.constant 0 : i32
    %c0_i32_0 = arith.constant 0 : i32
    %c0_i32_1 = arith.constant 0 : i32
    return %arg0, %c0_i32, %c0_i32_0 : i32, i32, i32
  }
}

</mosaic_0001>

<llo_original>
// kernel: tpu_custom_call.1
$region0: #{tpu_custom_call.1}
  #allocation0 [shape = 'u32[]', space=smem, size = 0x4, offset = 0x4, fixed_abs, tag = 'smem constant byte address 0x4 - core index']
  #allocation1 [shape = 'u32[72,128]{1,0:T(1,128)}', space=vmem, size = 0x9000, scoped, tag = 'internal scratch']
  #allocation2 [shape = 'f32[18,64]{1,0:T(8,128)}', space=vmem, size = 0x3000, scoped, tag = 'scratch operand']
  #allocation3 [shape = 'f32[20,128]{1,0:T(8,128)}', space=vmem, size = 0x3000, scoped, tag = 'scratch operand']
  %s0 = inlined_call_operand.hbm [shape: f32[2,16,64], index: 0, kind: input, shape index: {}]
  %s1 = inlined_call_operand.hbm [shape: f32[3,64,128], index: 1, kind: input, shape index: {}]
  %s2 = inlined_call_operand.hbm [shape: f32[3,128,128], index: 2, kind: input, shape index: {}]
  %s3 = inlined_call_operand.hbm [shape: f32[6,128], index: 3, kind: input, shape index: {}]
  %s4 = inlined_call_operand.hbm [shape: f32[2,16,128], index: 4, kind: output, shape index: {}]
  %s5 = sld [smem:[#allocation0]]
  $region65: #{tpu_custom_call.1} parent=0
    _
  %s7 = ssub.s32 1, %s5
  %s8 = scalar_select 0, %s7, %s5
  $region1: #{tpu_custom_call.1} parent=0
    #allocation4 [shape = 'u8[16384]{0}', space=vmem, size = 0x4000, scoped, tag = 'input window, operand 0']
    #allocation5 [shape = 's32[2]{0}', space=sflag, size = 0x8, scoped, tag = 'scoped memory for tpu_custom_call.1']
    #allocation6 [shape = 's32[2]{0}', space=sflag, size = 0x8, scoped, tag = 'scoped memory for tpu_custom_call.1']
    #allocation7 [shape = 'u8[98304]{0}', space=vmem, size = 0x18000, scoped, tag = 'input window, operand 1, single buffered']
    #allocation8 [shape = 's32[1]{0}', space=sflag, size = 0x4, scoped, tag = 'scoped memory for tpu_custom_call.1']
    #allocation9 [shape = 'u8[196608]{0}', space=vmem, size = 0x30000, scoped, tag = 'input window, operand 2, single buffered']
    #allocation10 [shape = 'u8[4096]{0}', space=vmem, size = 0x1000, scoped, tag = 'input window, operand 3, single buffered']
    #allocation11 [shape = 's32[1]{0}', space=sflag, size = 0x4, scoped, tag = 'scoped memory for tpu_custom_call.1']
    #allocation12 [shape = 'u8[16384]{0}', space=vmem, size = 0x4000, scoped, tag = 'output window, operand 0']
    %9 = vsyncpa [#allocation5], 0
    %s10 = scalar_lea.sflag [#allocation5], 1
    %11 = vsyncpa %s10, 0
    %12 = vsyncpa [#allocation8], 0
    %13 = vsyncpa [#allocation11], 0
    %14 = vsyncpa [#allocation6], 0
    %s15 = scalar_lea.sflag [#allocation6], 1
    %16 = vsyncpa %s15, 0
    loop: start=0, step=1, limit=4
    $region2: #{tpu_custom_call.1} parent=1 // loop_pre_header
      _
    $region3: #{tpu_custom_call.1} parent=1 // loop_header
      %s18 = sphi 0, %s22
      %p19 = scmp.ge.s32.totalorder %s18, 4
      %s28 = sphi 0, %s30
      %s31 = sphi 0, %s28
      %s32 = sphi 0, %s31
      %s48 = sphi 0, %s32
      %s52 = sphi 0, %s52
      %s54 = sphi 0, %s52
      %s55 = sphi 0, %s54
      %s69 = sphi 0, %s55
      %s73 = sphi 0, %s73
      %s75 = sphi 0, %s73
      %s76 = sphi 0, %s75
      %s90 = sphi 0, %s76
      %s94 = sphi 0, %s94
      %s96 = sphi 0, %s94
      %s97 = sphi 0, %s96
      %s111 = sphi 0, %s97
      %s117 = sphi 0, %s119
      %s120 = sphi 0, %s117
      %s121 = sphi 0, %s120
      %s137 = sphi 0, %s121
    $region4: #{tpu_custom_call.1} parent=1 // loop_header_branch
      %21 = sbr.rel (%p19) target = $region8
    $region5: #{tpu_custom_call.1} parent=1 // loop_body
      %s23 = ssub.s32 %s18, 1
      %s24 = ssub.s32 %s18, 2
      %s25 = sadd.s32 %s18, 1
      %s26 = ssub.s32 %s18, %s25
      %p27 = scmp.eq.s32.totalorder %s26, 0
      %s29 = sadd.s32 %s28, 1
      %s30 = scalar_select %p27, %s28, %s29
      %p33 = pneg %p27
      %p34 = scmp.eq.s32.totalorder %s18, 1
      %p35 = por %p33, %p34
      %p36 = scmp.ne.s32.totalorder %s28, %s31
      %p37 = scmp.eq.s32.totalorder %s18, 0
      %p38 = por %p36, %p37
      %p39 = scmp.ne.s32.totalorder %s28, %s31
      %p40 = scmp.eq.s32.totalorder %s23, 1
      %p41 = por %p39, %p40
      %p42 = scmp.ne.s32.totalorder %s31, %s32
      %p43 = scmp.eq.s32.totalorder %s23, 0
      %p44 = por %p42, %p43
      %p45 = scmp.ne.s32.totalorder %s31, %s32
      %p46 = scmp.eq.s32.totalorder %s24, 1
      %p47 = por %p45, %p46
      %p49 = scmp.ne.s32.totalorder %s32, %s48
      %p50 = scmp.eq.s32.totalorder %s24, 0
      %p51 = por %p49, %p50
      %s53 = sadd.s32 %s52, 1
      %p56 = scmp.eq.s32.totalorder %s18, 1
      %p57 = scmp.ne.s32.totalorder %s52, %s54
      %p58 = scmp.eq.s32.totalorder %s18, 0
      %p59 = por %p57, %p58
      %p60 = scmp.ne.s32.totalorder %s52, %s54
      %p61 = scmp.eq.s32.totalorder %s23, 1
      %p62 = por %p60, %p61
      %p63 = scmp.ne.s32.totalorder %s54, %s55
      %p64 = scmp.eq.s32.totalorder %s23, 0
      %p65 = por %p63, %p64
      %p66 = scmp.ne.s32.totalorder %s54, %s55
      %p67 = scmp.eq.s32.totalorder %s24, 1
      %p68 = por %p66, %p67
      %p70 = scmp.ne.s32.totalorder %s55, %s69
      %p71 = scmp.eq.s32.totalorder %s24, 0
      %p72 = por %p70, %p71
      %s74 = sadd.s32 %s73, 1
      %p77 = scmp.eq.s32.totalorder %s18, 1
      %p78 = scmp.ne.s32.totalorder %s73, %s75
      %p79 = scmp.eq.s32.totalorder %s18, 0
      %p80 = por %p78, %p79
      %p81 = scmp.ne.s32.totalorder %s73, %s75
      %p82 = scmp.eq.s32.totalorder %s23, 1
      %p83 = por %p81, %p82
      %p84 = scmp.ne.s32.totalorder %s75, %s76
      %p85 = scmp.eq.s32.totalorder %s23, 0
      %p86 = por %p84, %p85
      %p87 = scmp.ne.s32.totalorder %s75, %s76
      %p88 = scmp.eq.s32.totalorder %s24, 1
      %p89 = por %p87, %p88
      %p91 = scmp.ne.s32.totalorder %s76, %s90
      %p92 = scmp.eq.s32.totalorder %s24, 0
      %p93 = por %p91, %p92
      %s95 = sadd.s32 %s94, 1
      %p98 = scmp.eq.s32.totalorder %s18, 1
      %p99 = scmp.ne.s32.totalorder %s94, %s96
      %p100 = scmp.eq.s32.totalorder %s18, 0
      %p101 = por %p99, %p100
      %p102 = scmp.ne.s32.totalorder %s94, %s96
      %p103 = scmp.eq.s32.totalorder %s23, 1
      %p104 = por %p102, %p103
      %p105 = scmp.ne.s32.totalorder %s96, %s97
      %p106 = scmp.eq.s32.totalorder %s23, 0
      %p107 = por %p105, %p106
      %p108 = scmp.ne.s32.totalorder %s96, %s97
      %p109 = scmp.eq.s32.totalorder %s24, 1
      %p110 = por %p108, %p109
      %p112 = scmp.ne.s32.totalorder %s97, %s111
      %p113 = scmp.eq.s32.totalorder %s24, 0
      %p114 = por %p112, %p113
      %s115 = ssub.s32 %s18, %s25
      %p116 = scmp.eq.s32.totalorder %s115, 0
      %s118 = sadd.s32 %s117, 1
      %s119 = scalar_select %p116, %s117, %s118
      %p122 = pneg %p116
      %p123 = scmp.eq.s32.totalorder %s18, 1
      %p124 = por %p122, %p123
      %p125 = scmp.ne.s32.totalorder %s117, %s120
      %p126 = scmp.eq.s32.totalorder %s18, 0
      %p127 = por %p125, %p126
      %p128 = scmp.ne.s32.totalorder %s117, %s120
      %p129 = scmp.eq.s32.totalorder %s23, 1
      %p130 = por %p128, %p129
      %p131 = scmp.ne.s32.totalorder %s120, %s121
      %p132 = scmp.eq.s32.totalorder %s23, 0
      %p133 = por %p131, %p132
      %p134 = scmp.ne.s32.totalorder %s120, %s121
      %p135 = scmp.eq.s32.totalorder %s24, 1
      %p136 = por %p134, %p135
      %p138 = scmp.ne.s32.totalorder %s121, %s137
      %p139 = scmp.eq.s32.totalorder %s24, 0
      %p140 = por %p138, %p139
      %p141 = scmp.le.s32.totalorder 1, %s18
      %p142 = scmp.lt.s32.totalorder %s18, 3
      %p143 = pnand %p141, %p142
      %p144 = pneg %p143
      // Predicated region
      $region9: #{tpu_custom_call.1} parent=5 // pred_check
        _
      $region10: #{tpu_custom_call.1} parent=5 // pred_check_branch
        %146 = sbr.rel (%p143) target = $region12
      $region11: #{tpu_custom_call.1} parent=5 // pred_region
        %s147 = ssub.s32 %s18, 1
        // Predicated region
        $region13: #{tpu_custom_call.1} parent=11 // pred_check
          %p148 = pneg %p65
        $region14: #{tpu_custom_call.1} parent=11 // pred_check_branch
          %150 = sbr.rel (%p148) target = $region16
        $region15: #{tpu_custom_call.1} parent=11 // pred_region
          %152 = vsyncadd [#allocation8], 0
          %s153 = sshll.u32 %s1, 4
          %s154 = int_to_ptr.hbm [resolvable:$true] %s153
          %s155 = sshll.u32 [#allocation7], 4
          %s156 = int_to_ptr.vmem [resolvable:$true] %s155
          %161 = dma.hbm_to_vmem [thread:$0]  %s154, 3072, %s156, [#allocation8], 128, 128, 8
        $region16: #{tpu_custom_call.1} parent=11 // pred_fallthru
          _
        // Predicated region
        $region17: #{tpu_custom_call.1} parent=11 // pred_check
          %p162 = pneg %p86
        $region18: #{tpu_custom_call.1} parent=11 // pred_check_branch
          %164 = sbr.rel (%p162) target = $region20
        $region19: #{tpu_custom_call.1} parent=11 // pred_region
          %166 = vsyncadd [#allocation8], 0
          %s167 = sshll.u32 %s2, 4
          %s168 = int_to_ptr.hbm [resolvable:$true] %s167
          %s169 = sshll.u32 [#allocation9], 4
          %s170 = int_to_ptr.vmem [resolvable:$true] %s169
          %175 = dma.hbm_to_vmem [thread:$0]  %s168, 6144, %s170, [#allocation8], 128, 128, 8
        $region20: #{tpu_custom_call.1} parent=11 // pred_fallthru
          _
        // Predicated region
        $region21: #{tpu_custom_call.1} parent=11 // pred_check
          %p176 = pneg %p107
        $region22: #{tpu_custom_call.1} parent=11 // pred_check_branch
          %178 = sbr.rel (%p176) target = $region24
        $region23: #{tpu_custom_call.1} parent=11 // pred_region
          %180 = vsyncadd [#allocation11], 0
          %s182 = sshll.u32 %s3, 4
          %s183 = int_to_ptr.hbm [resolvable:$true] %s182
          %s184 = sshll.u32 [#allocation10], 4
          %s185 = int_to_ptr.vmem [resolvable:$true] %s184
          %187 = dma.hbm_to_vmem [thread:$0]  %s183, 128, %s185, [#allocation11]
        $region24: #{tpu_custom_call.1} parent=11 // pred_fallthru
          _
      $region12: #{tpu_custom_call.1} parent=5 // pred_fallthru
        _
      %p188 = scmp.lt.s32.totalorder %s18, 2
      // Predicated region
      $region25: #{tpu_custom_call.1} parent=5 // pred_check
        %p189 = pneg %p188
      $region26: #{tpu_custom_call.1} parent=5 // pred_check_branch
        %191 = sbr.rel (%p189) target = $region28
      $region27: #{tpu_custom_call.1} parent=5 // pred_region
        // Predicated region
        $region29: #{tpu_custom_call.1} parent=27 // pred_check
          %p192 = pneg %p38
        $region30: #{tpu_custom_call.1} parent=27 // pred_check_branch
          %194 = sbr.rel (%p192) target = $region32
        $region31: #{tpu_custom_call.1} parent=27 // pred_region
          %s195 = sand.u32 %s28, 1
          %s196 = scalar_lea.sflag [#allocation5], %s195
          %s197 = sand.u32 %s28, 1
          %s198 = smul.addr %s197, 16
          %s199 = scalar_lea.vmem [#allocation4], %s198
          %201 = vsyncadd %s196, 0
          %s202 = smul.addr %s18, 2
          %s203 = smul.addr %s202, 8
          %s204 = scalar_lea.hbm %s0, %s203
          %s205 = sshll.u32 %s204, 4
          %s206 = int_to_ptr.hbm [resolvable:$true] %s205
          %s207 = sshll.u32 %s199, 4
          %s208 = int_to_ptr.vmem [resolvable:$true] %s207
          %213 = dma.hbm_to_vmem [thread:$0]  %s206, 256, %s208, %s196, 128, 128, 8
        $region32: #{tpu_custom_call.1} parent=27 // pred_fallthru
          _
      $region28: #{tpu_custom_call.1} parent=5 // pred_fallthru
        _
      %p214 = scmp.le.s32.totalorder 1, %s18
      %p215 = scmp.lt.s32.totalorder %s18, 3
      %p216 = pnand %p214, %p215
      %p217 = pneg %p216
      // Predicated region
      $region33: #{tpu_custom_call.1} parent=5 // pred_check
        _
      $region34: #{tpu_custom_call.1} parent=5 // pred_check_branch
        %219 = sbr.rel (%p216) target = $region36
      $region35: #{tpu_custom_call.1} parent=5 // pred_region
        %s220 = ssub.s32 %s18, 1
        %s221 = sand.u32 %s31, 1
        %s222 = scalar_lea.sflag [#allocation5], %s221
        %s223 = sand.u32 %s31, 1
        %s224 = smul.addr %s223, 16
        %s225 = scalar_lea.vmem [#allocation4], %s224
        // Predicated region
        $region37: #{tpu_custom_call.1} parent=35 // pred_check
          %p226 = pneg %p44
        $region38: #{tpu_custom_call.1} parent=35 // pred_check_branch
          %228 = sbr.rel (%p226) target = $region40
        $region39: #{tpu_custom_call.1} parent=35 // pred_region
          %230 = dma.done %s222, 256
        $region40: #{tpu_custom_call.1} parent=35 // pred_fallthru
          _
        // Predicated region
        $region41: #{tpu_custom_call.1} parent=35 // pred_check
          %p231 = pneg %p65
        $region42: #{tpu_custom_call.1} parent=35 // pred_check_branch
          %233 = sbr.rel (%p231) target = $region44
        $region43: #{tpu_custom_call.1} parent=35 // pred_region
          %235 = dma.done [#allocation8], 3072
        $region44: #{tpu_custom_call.1} parent=35 // pred_fallthru
          _
        // Predicated region
        $region45: #{tpu_custom_call.1} parent=35 // pred_check
          %p236 = pneg %p86
        $region46: #{tpu_custom_call.1} parent=35 // pred_check_branch
          %238 = sbr.rel (%p236) target = $region48
        $region47: #{tpu_custom_call.1} parent=35 // pred_region
          %240 = dma.done [#allocation8], 6144
        $region48: #{tpu_custom_call.1} parent=35 // pred_fallthru
          _
        // Predicated region
        $region49: #{tpu_custom_call.1} parent=35 // pred_check
          %p241 = pneg %p107
        $region50: #{tpu_custom_call.1} parent=35 // pred_check_branch
          %243 = sbr.rel (%p241) target = $region52
        $region51: #{tpu_custom_call.1} parent=35 // pred_region
          %245 = dma.done [#allocation11], 128
        $region52: #{tpu_custom_call.1} parent=35 // pred_fallthru
          _
        %s246 = sand.u32 %s31, 1
        %s247 = scalar_lea.sflag [#allocation5], %s246
        %s248 = sand.u32 %s31, 1
        %s249 = smul.addr %s248, 16
        %s250 = scalar_lea.vmem [#allocation4], %s249
        %p251 = pneg %p44
        %p252 = pneg %p41
        %p253 = pneg %p65
        %p254 = pneg %p62
        %p255 = pneg %p86
        %p256 = pneg %p83
        %p257 = pneg %p107
        %p258 = pneg %p104
        %p259 = pneg %p133
        %p260 = pneg %p130
        %s261 = sand.u32 %s120, 1
        %s262 = scalar_lea.sflag [#allocation6], %s261
        %s263 = sand.u32 %s120, 1
        %s264 = smul.addr %s263, 16
        %s265 = scalar_lea.vmem [#allocation12], %s264
        %v266 = vld [vmem:[#allocation10] sm:$0x3f]
        %vm267 = vcmask 516096
        %268 = vst.msk [vmem:[#allocation2] sm:$0x1] %vm267, 0.0
        %269 = vst.msk [vmem:[#allocation2 + $0x11] sm:$0x1] %vm267, 0.0
        %v270 = vld [vmem:[%s225] sm:$0xff]
        %v271 = vld [vmem:[%s225 + $0x8] sm:$0xff]
        %vm272 = vcmask 523264
        %273 = vst.msk [vmem:[#allocation2 + $0x1] sm:$0xff] %vm272, %v270
        %274 = vst.msk [vmem:[#allocation2 + $0x9] sm:$0xff] %vm272, %v271
        %v275 = vld [vmem:[#allocation2] sm:$0xff]
        %v276 = vld [vmem:[#allocation2 + $0x8] sm:$0xff]
        %v277 = vld [vmem:[#allocation7] sm:$0xff]
        %v278 = vld [vmem:[#allocation7 + $0x8] sm:$0xff]
        %v279 = vld [vmem:[#allocation7 + $0x10] sm:$0xff]
        %v280 = vld [vmem:[#allocation7 + $0x18] sm:$0xff]
        %v281 = vld [vmem:[#allocation7 + $0x20] sm:$0xff]
        %v282 = vld [vmem:[#allocation7 + $0x28] sm:$0xff]
        %v283 = vld [vmem:[#allocation7 + $0x30] sm:$0xff]
        %v284 = vld [vmem:[#allocation7 + $0x38] sm:$0xff]
        %v285 = vld [vmem:[#allocation2 + $0x1] sm:$0xff]
        %v286 = vld [vmem:[#allocation2 + $0x9] sm:$0xff]
        %s287 = scalar_lea.vmem [#allocation7], 64
        %v288 = vld [vmem:[%s287] sm:$0xff]
        %v289 = vld [vmem:[%s287 + $0x8] sm:$0xff]
        %v290 = vld [vmem:[%s287 + $0x10] sm:$0xff]
        %v291 = vld [vmem:[%s287 + $0x18] sm:$0xff]
        %v292 = vld [vmem:[%s287 + $0x20] sm:$0xff]
        %v293 = vld [vmem:[%s287 + $0x28] sm:$0xff]
        %v294 = vld [vmem:[%s287 + $0x30] sm:$0xff]
        %v295 = vld [vmem:[%s287 + $0x38] sm:$0xff]
        %v297 = vsel %vm272, %v285, 0
        %v300 = vsel %vm272, %v286, 0
        %302 = vmatpush.msra.mxu0 0.0
        %303 = vmatpush.msra.mxu0 0.0
        %304 = vmatpush.msra.mxu0 0.0
        %305 = vmatpush.msra.mxu0 0.0
        %306 = vmatpush.msra.mxu0 0.0
        %307 = vmatpush.msra.mxu0 0.0
        %308 = vmatpush.msra.mxu0 0.0
        %309 = vmatpush.msra.mxu0 0.0
        %v310 = vand.u32 %v295, 4294901760
        %311 = vmatpush.msra.mxu0 %v310
        %v312 = vand.u32 %v294, 4294901760
        %313 = vmatpush.msra.mxu0 %v312
        %v314 = vand.u32 %v293, 4294901760
        %315 = vmatpush.msra.mxu0 %v314
        %v316 = vand.u32 %v292, 4294901760
        %317 = vmatpush.msra.mxu0 %v316
        %v318 = vand.u32 %v291, 4294901760
        %319 = vmatpush.msra.mxu0 %v318
        %v320 = vand.u32 %v290, 4294901760
        %321 = vmatpush.msra.mxu0 %v320
        %v322 = vand.u32 %v289, 4294901760
        %323 = vmatpush.msra.mxu0 %v322
        %v324 = vand.u32 %v288, 4294901760
        %325 = vmatpush.msra.mxu0 %v324
        %v326 = vand.u32 %v297, 4294901760
        %v327 = vsub.f32 %v297, %v326
        %v328 = vand.u32 %v327, 4294901760
        %v329 = vsub.f32 %v327, %v328
        %v330 = vand.u32 %v329, 4294901760
        %331 = vmatmul.f32.gmra.mxu0 %v330
        %v332 = vpop.f32.mrf.mxu0
        %v333 = vadd.f32 0.0, %v332
        %v334 = vand.u32 %v300, 4294901760
        %v335 = vsub.f32 %v300, %v334
        %v336 = vand.u32 %v335, 4294901760
        %v337 = vsub.f32 %v335, %v336
        %v338 = vand.u32 %v337, 4294901760
        %339 = vmatmul.f32.gmra.mxu0 %v338
        %v340 = vpop.f32.mrf.mxu0
        %v341 = vadd.f32 0.0, %v340
        %342 = vdwg.mxu0
        %343 = vmatpush.msra.mxu0 0.0
        %344 = vmatpush.msra.mxu0 0.0
        %345 = vmatpush.msra.mxu0 0.0
        %346 = vmatpush.msra.mxu0 0.0
        %347 = vmatpush.msra.mxu0 0.0
        %348 = vmatpush.msra.mxu0 0.0
        %349 = vmatpush.msra.mxu0 0.0
        %350 = vmatpush.msra.mxu0 0.0
        %v351 = vand.u32 %v295, 4294901760
        %v352 = vsub.f32 %v295, %v351
        %v353 = vand.u32 %v352, 4294901760
        %v354 = vsub.f32 %v352, %v353
        %v355 = vand.u32 %v354, 4294901760
        %356 = vmatpush.msra.mxu0 %v355
        %v357 = vand.u32 %v294, 4294901760
        %v358 = vsub.f32 %v294, %v357
        %v359 = vand.u32 %v358, 4294901760
        %v360 = vsub.f32 %v358, %v359
        %v361 = vand.u32 %v360, 4294901760
        %362 = vmatpush.msra.mxu0 %v361
        %v363 = vand.u32 %v293, 4294901760
        %v364 = vsub.f32 %v293, %v363
        %v365 = vand.u32 %v364, 4294901760
        %v366 = vsub.f32 %v364, %v365
        %v367 = vand.u32 %v366, 4294901760
        %368 = vmatpush.msra.mxu0 %v367
        %v369 = vand.u32 %v292, 4294901760
        %v370 = vsub.f32 %v292, %v369
        %v371 = vand.u32 %v370, 4294901760
        %v372 = vsub.f32 %v370, %v371
        %v373 = vand.u32 %v372, 4294901760
        %374 = vmatpush.msra.mxu0 %v373
        %v375 = vand.u32 %v291, 4294901760
        %v376 = vsub.f32 %v291, %v375
        %v377 = vand.u32 %v376, 4294901760
        %v378 = vsub.f32 %v376, %v377
        %v379 = vand.u32 %v378, 4294901760
        %380 = vmatpush.msra.mxu0 %v379
        %v381 = vand.u32 %v290, 4294901760
        %v382 = vsub.f32 %v290, %v381
        %v383 = vand.u32 %v382, 4294901760
        %v384 = vsub.f32 %v382, %v383
        %v385 = vand.u32 %v384, 4294901760
        %386 = vmatpush.msra.mxu0 %v385
        %v387 = vand.u32 %v289, 4294901760
        %v388 = vsub.f32 %v289, %v387
        %v389 = vand.u32 %v388, 4294901760
        %v390 = vsub.f32 %v388, %v389
        %v391 = vand.u32 %v390, 4294901760
        %392 = vmatpush.msra.mxu0 %v391
        %v393 = vand.u32 %v288, 4294901760
        %v394 = vsub.f32 %v288, %v393
        %v395 = vand.u32 %v394, 4294901760
        %v396 = vsub.f32 %v394, %v395
        %v397 = vand.u32 %v396, 4294901760
        %398 = vmatpush.msra.mxu0 %v397
        %v399 = vand.u32 %v297, 4294901760
        %400 = vmatmul.f32.gmra.mxu0 %v399
        %v401 = vpop.f32.mrf.mxu0
        %v402 = vadd.f32 %v333, %v401
        %v403 = vand.u32 %v300, 4294901760
        %404 = vmatmul.f32.gmra.mxu0 %v403
        %v405 = vpop.f32.mrf.mxu0
        %v406 = vadd.f32 %v341, %v405
        %407 = vdwg.mxu0
        %408 = vmatpush.msra.mxu0 0.0
        %409 = vmatpush.msra.mxu0 0.0
        %410 = vmatpush.msra.mxu0 0.0
        %411 = vmatpush.msra.mxu0 0.0
        %412 = vmatpush.msra.mxu0 0.0
        %413 = vmatpush.msra.mxu0 0.0
        %414 = vmatpush.msra.mxu0 0.0
        %415 = vmatpush.msra.mxu0 0.0
        %v416 = vand.u32 %v295, 4294901760
        %v417 = vsub.f32 %v295, %v416
        %418 = vmatpush.msra.mxu0 %v417
        %v419 = vand.u32 %v294, 4294901760
        %v420 = vsub.f32 %v294, %v419
        %421 = vmatpush.msra.mxu0 %v420
        %v422 = vand.u32 %v293, 4294901760
        %v423 = vsub.f32 %v293, %v422
        %424 = vmatpush.msra.mxu0 %v423
        %v425 = vand.u32 %v292, 4294901760
        %v426 = vsub.f32 %v292, %v425
        %427 = vmatpush.msra.mxu0 %v426
        %v428 = vand.u32 %v291, 4294901760
        %v429 = vsub.f32 %v291, %v428
        %430 = vmatpush.msra.mxu0 %v429
        %v431 = vand.u32 %v290, 4294901760
        %v432 = vsub.f32 %v290, %v431
        %433 = vmatpush.msra.mxu0 %v432
        %v434 = vand.u32 %v289, 4294901760
        %v435 = vsub.f32 %v289, %v434
        %436 = vmatpush.msra.mxu0 %v435
        %v437 = vand.u32 %v288, 4294901760
        %v438 = vsub.f32 %v288, %v437
        %439 = vmatpush.msra.mxu0 %v438
        %v440 = vand.u32 %v297, 4294901760
        %v441 = vsub.f32 %v297, %v440
        %442 = vmatmul.f32.gmra.mxu0 %v441
        %v443 = vpop.f32.mrf.mxu0
        %v444 = vadd.f32 %v402, %v443
        %v445 = vand.u32 %v300, 4294901760
        %v446 = vsub.f32 %v300, %v445
        %447 = vmatmul.f32.gmra.mxu0 %v446
        %v448 = vpop.f32.mrf.mxu0
        %v449 = vadd.f32 %v406, %v448
        %450 = vdwg.mxu0
        %451 = vmatpush.msra.mxu0 0.0
        %452 = vmatpush.msra.mxu0 0.0
        %453 = vmatpush.msra.mxu0 0.0
        %454 = vmatpush.msra.mxu0 0.0
        %455 = vmatpush.msra.mxu0 0.0
        %456 = vmatpush.msra.mxu0 0.0
        %457 = vmatpush.msra.mxu0 0.0
        %458 = vmatpush.msra.mxu0 0.0
        %v459 = vand.u32 %v295, 4294901760
        %460 = vmatpush.msra.mxu0 %v459
        %v461 = vand.u32 %v294, 4294901760
        %462 = vmatpush.msra.mxu0 %v461
        %v463 = vand.u32 %v293, 4294901760
        %464 = vmatpush.msra.mxu0 %v463
        %v465 = vand.u32 %v292, 4294901760
        %466 = vmatpush.msra.mxu0 %v465
        %v467 = vand.u32 %v291, 4294901760
        %468 = vmatpush.msra.mxu0 %v467
        %v469 = vand.u32 %v290, 4294901760
        %470 = vmatpush.msra.mxu0 %v469
        %v471 = vand.u32 %v289, 4294901760
        %472 = vmatpush.msra.mxu0 %v471
        %v473 = vand.u32 %v288, 4294901760
        %474 = vmatpush.msra.mxu0 %v473
        %v475 = vand.u32 %v297, 4294901760
        %v476 = vsub.f32 %v297, %v475
        %v477 = vand.u32 %v476, 4294901760
        %478 = vmatmul.f32.gmra.mxu0 %v477
        %v479 = vpop.f32.mrf.mxu0
        %v480 = vadd.f32 %v444, %v479
        %v481 = vand.u32 %v300, 4294901760
        %v482 = vsub.f32 %v300, %v481
        %v483 = vand.u32 %v482, 4294901760
        %484 = vmatmul.f32.gmra.mxu0 %v483
        %v485 = vpop.f32.mrf.mxu0
        %v486 = vadd.f32 %v449, %v485
        %487 = vdwg.mxu0
        %488 = vmatpush.msra.mxu0 0.0
        %489 = vmatpush.msra.mxu0 0.0
        %490 = vmatpush.msra.mxu0 0.0
        %491 = vmatpush.msra.mxu0 0.0
        %492 = vmatpush.msra.mxu0 0.0
        %493 = vmatpush.msra.mxu0 0.0
        %494 = vmatpush.msra.mxu0 0.0
        %495 = vmatpush.msra.mxu0 0.0
        %v496 = vand.u32 %v295, 4294901760
        %v497 = vsub.f32 %v295, %v496
        %v498 = vand.u32 %v497, 4294901760
        %499 = vmatpush.msra.mxu0 %v498
        %v500 = vand.u32 %v294, 4294901760
        %v501 = vsub.f32 %v294, %v500
        %v502 = vand.u32 %v501, 4294901760
        %503 = vmatpush.msra.mxu0 %v502
        %v504 = vand.u32 %v293, 4294901760
        %v505 = vsub.f32 %v293, %v504
        %v506 = vand.u32 %v505, 4294901760
        %507 = vmatpush.msra.mxu0 %v506
        %v508 = vand.u32 %v292, 4294901760
        %v509 = vsub.f32 %v292, %v508
        %v510 = vand.u32 %v509, 4294901760
        %511 = vmatpush.msra.mxu0 %v510
        %v512 = vand.u32 %v291, 4294901760
        %v513 = vsub.f32 %v291, %v512
        %v514 = vand.u32 %v513, 4294901760
        %515 = vmatpush.msra.mxu0 %v514
        %v516 = vand.u32 %v290, 4294901760
        %v517 = vsub.f32 %v290, %v516
        %v518 = vand.u32 %v517, 4294901760
        %519 = vmatpush.msra.mxu0 %v518
        %v520 = vand.u32 %v289, 4294901760
        %v521 = vsub.f32 %v289, %v520
        %v522 = vand.u32 %v521, 4294901760
        %523 = vmatpush.msra.mxu0 %v522
        %v524 = vand.u32 %v288, 4294901760
        %v525 = vsub.f32 %v288, %v524
        %v526 = vand.u32 %v525, 4294901760
        %527 = vmatpush.msra.mxu0 %v526
        %v528 = vand.u32 %v297, 4294901760
        %529 = vmatmul.f32.gmra.mxu0 %v528
        %v530 = vpop.f32.mrf.mxu0
        %v531 = vadd.f32 %v480, %v530
        %v532 = vand.u32 %v300, 4294901760
        %533 = vmatmul.f32.gmra.mxu0 %v532
        %v534 = vpop.f32.mrf.mxu0
        %v535 = vadd.f32 %v486, %v534
        %536 = vdwg.mxu0
        %537 = vmatpush.msra.mxu0 0.0
        %538 = vmatpush.msra.mxu0 0.0
        %539 = vmatpush.msra.mxu0 0.0
        %540 = vmatpush.msra.mxu0 0.0
        %541 = vmatpush.msra.mxu0 0.0
        %542 = vmatpush.msra.mxu0 0.0
        %543 = vmatpush.msra.mxu0 0.0
        %544 = vmatpush.msra.mxu0 0.0
        %v545 = vand.u32 %v295, 4294901760
        %546 = vmatpush.msra.mxu0 %v545
        %v547 = vand.u32 %v294, 4294901760
        %548 = vmatpush.msra.mxu0 %v547
        %v549 = vand.u32 %v293, 4294901760
        %550 = vmatpush.msra.mxu0 %v549
        %v551 = vand.u32 %v292, 4294901760
        %552 = vmatpush.msra.mxu0 %v551
        %v553 = vand.u32 %v291, 4294901760
        %554 = vmatpush.msra.mxu0 %v553
        %v555 = vand.u32 %v290, 4294901760
        %556 = vmatpush.msra.mxu0 %v555
        %v557 = vand.u32 %v289, 4294901760
        %558 = vmatpush.msra.mxu0 %v557
        %v559 = vand.u32 %v288, 4294901760
        %560 = vmatpush.msra.mxu0 %v559
        %v561 = vand.u32 %v297, 4294901760
        %562 = vmatmul.f32.gmra.mxu0 %v561
        %v563 = vpop.f32.mrf.mxu0
        %v564 = vadd.f32 %v531, %v563
        %v565 = vand.u32 %v300, 4294901760
        %566 = vmatmul.f32.gmra.mxu0 %v565
        %v567 = vpop.f32.mrf.mxu0
        %v568 = vadd.f32 %v535, %v567
        %569 = vdwg.mxu0
        %v571 = vsel %vm272, %v275, 0
        %v574 = vsel %vm272, %v276, 0
        %576 = vmatpush.msra.mxu0 0.0
        %577 = vmatpush.msra.mxu0 0.0
        %578 = vmatpush.msra.mxu0 0.0
        %579 = vmatpush.msra.mxu0 0.0
        %580 = vmatpush.msra.mxu0 0.0
        %581 = vmatpush.msra.mxu0 0.0
        %582 = vmatpush.msra.mxu0 0.0
        %583 = vmatpush.msra.mxu0 0.0
        %v584 = vand.u32 %v284, 4294901760
        %585 = vmatpush.msra.mxu0 %v584
        %v586 = vand.u32 %v283, 4294901760
        %587 = vmatpush.msra.mxu0 %v586
        %v588 = vand.u32 %v282, 4294901760
        %589 = vmatpush.msra.mxu0 %v588
        %v590 = vand.u32 %v281, 4294901760
        %591 = vmatpush.msra.mxu0 %v590
        %v592 = vand.u32 %v280, 4294901760
        %593 = vmatpush.msra.mxu0 %v592
        %v594 = vand.u32 %v279, 4294901760
        %595 = vmatpush.msra.mxu0 %v594
        %v596 = vand.u32 %v278, 4294901760
        %597 = vmatpush.msra.mxu0 %v596
        %v598 = vand.u32 %v277, 4294901760
        %599 = vmatpush.msra.mxu0 %v598
        %v600 = vand.u32 %v571, 4294901760
        %v601 = vsub.f32 %v571, %v600
        %v602 = vand.u32 %v601, 4294901760
        %v603 = vsub.f32 %v601, %v602
        %v604 = vand.u32 %v603, 4294901760
        %605 = vmatmul.f32.gmra.mxu0 %v604
        %v606 = vpop.f32.mrf.mxu0
        %v607 = vadd.f32 %v564, %v606
        %v608 = vand.u32 %v574, 4294901760
        %v609 = vsub.f32 %v574, %v608
        %v610 = vand.u32 %v609, 4294901760
        %v611 = vsub.f32 %v609, %v610
        %v612 = vand.u32 %v611, 4294901760
        %613 = vmatmul.f32.gmra.mxu0 %v612
        %v614 = vpop.f32.mrf.mxu0
        %v615 = vadd.f32 %v568, %v614
        %616 = vdwg.mxu0
        %617 = vmatpush.msra.mxu0 0.0
        %618 = vmatpush.msra.mxu0 0.0
        %619 = vmatpush.msra.mxu0 0.0
        %620 = vmatpush.msra.mxu0 0.0
        %621 = vmatpush.msra.mxu0 0.0
        %622 = vmatpush.msra.mxu0 0.0
        %623 = vmatpush.msra.mxu0 0.0
        %624 = vmatpush.msra.mxu0 0.0
        %v625 = vand.u32 %v284, 4294901760
        %v626 = vsub.f32 %v284, %v625
        %v627 = vand.u32 %v626, 4294901760
        %v628 = vsub.f32 %v626, %v627
        %v629 = vand.u32 %v628, 4294901760
        %630 = vmatpush.msra.mxu0 %v629
        %v631 = vand.u32 %v283, 4294901760
        %v632 = vsub.f32 %v283, %v631
        %v633 = vand.u32 %v632, 4294901760
        %v634 = vsub.f32 %v632, %v633
        %v635 = vand.u32 %v634, 4294901760
        %636 = vmatpush.msra.mxu0 %v635
        %v637 = vand.u32 %v282, 4294901760
        %v638 = vsub.f32 %v282, %v637
        %v639 = vand.u32 %v638, 4294901760
        %v640 = vsub.f32 %v638, %v639
        %v641 = vand.u32 %v640, 4294901760
        %642 = vmatpush.msra.mxu0 %v641
        %v643 = vand.u32 %v281, 4294901760
        %v644 = vsub.f32 %v281, %v643
        %v645 = vand.u32 %v644, 4294901760
        %v646 = vsub.f32 %v644, %v645
        %v647 = vand.u32 %v646, 4294901760
        %648 = vmatpush.msra.mxu0 %v647
        %v649 = vand.u32 %v280, 4294901760
        %v650 = vsub.f32 %v280, %v649
        %v651 = vand.u32 %v650, 4294901760
        %v652 = vsub.f32 %v650, %v651
        %v653 = vand.u32 %v652, 4294901760
        %654 = vmatpush.msra.mxu0 %v653
        %v655 = vand.u32 %v279, 4294901760
        %v656 = vsub.f32 %v279, %v655
        %v657 = vand.u32 %v656, 4294901760
        %v658 = vsub.f32 %v656, %v657
        %v659 = vand.u32 %v658, 4294901760
        %660 = vmatpush.msra.mxu0 %v659
        %v661 = vand.u32 %v278, 4294901760
        %v662 = vsub.f32 %v278, %v661
        %v663 = vand.u32 %v662, 4294901760
        %v664 = vsub.f32 %v662, %v663
        %v665 = vand.u32 %v664, 4294901760
        %666 = vmatpush.msra.mxu0 %v665
        %v667 = vand.u32 %v277, 4294901760
        %v668 = vsub.f32 %v277, %v667
        %v669 = vand.u32 %v668, 4294901760
        %v670 = vsub.f32 %v668, %v669
        %v671 = vand.u32 %v670, 4294901760
        %672 = vmatpush.msra.mxu0 %v671
        %v673 = vand.u32 %v571, 4294901760
        %674 = vmatmul.f32.gmra.mxu0 %v673
        %v675 = vpop.f32.mrf.mxu0
        %v676 = vadd.f32 %v607, %v675
        %v677 = vand.u32 %v574, 4294901760
        %678 = vmatmul.f32.gmra.mxu0 %v677
        %v679 = vpop.f32.mrf.mxu0
        %v680 = vadd.f32 %v615, %v679
        %681 = vdwg.mxu0
        %682 = vmatpush.msra.mxu0 0.0
        %683 = vmatpush.msra.mxu0 0.0
        %684 = vmatpush.msra.mxu0 0.0
        %685 = vmatpush.msra.mxu0 0.0
        %686 = vmatpush.msra.mxu0 0.0
        %687 = vmatpush.msra.mxu0 0.0
        %688 = vmatpush.msra.mxu0 0.0
        %689 = vmatpush.msra.mxu0 0.0
        %v690 = vand.u32 %v284, 4294901760
        %v691 = vsub.f32 %v284, %v690
        %692 = vmatpush.msra.mxu0 %v691
        %v693 = vand.u32 %v283, 4294901760
        %v694 = vsub.f32 %v283, %v693
        %695 = vmatpush.msra.mxu0 %v694
        %v696 = vand.u32 %v282, 4294901760
        %v697 = vsub.f32 %v282, %v696
        %698 = vmatpush.msra.mxu0 %v697
        %v699 = vand.u32 %v281, 4294901760
        %v700 = vsub.f32 %v281, %v699
        %701 = vmatpush.msra.mxu0 %v700
        %v702 = vand.u32 %v280, 4294901760
        %v703 = vsub.f32 %v280, %v702
        %704 = vmatpush.msra.mxu0 %v703
        %v705 = vand.u32 %v279, 4294901760
        %v706 = vsub.f32 %v279, %v705
        %707 = vmatpush.msra.mxu0 %v706
        %v708 = vand.u32 %v278, 4294901760
        %v709 = vsub.f32 %v278, %v708
        %710 = vmatpush.msra.mxu0 %v709
        %v711 = vand.u32 %v277, 4294901760
        %v712 = vsub.f32 %v277, %v711
        %713 = vmatpush.msra.mxu0 %v712
        %v714 = vand.u32 %v571, 4294901760
        %v715 = vsub.f32 %v571, %v714
        %716 = vmatmul.f32.gmra.mxu0 %v715
        %v717 = vpop.f32.mrf.mxu0
        %v718 = vadd.f32 %v676, %v717
        %v719 = vand.u32 %v574, 4294901760
        %v720 = vsub.f32 %v574, %v719
        %721 = vmatmul.f32.gmra.mxu0 %v720
        %v722 = vpop.f32.mrf.mxu0
        %v723 = vadd.f32 %v680, %v722
        %724 = vdwg.mxu0
        %725 = vmatpush.msra.mxu0 0.0
        %726 = vmatpush.msra.mxu0 0.0
        %727 = vmatpush.msra.mxu0 0.0
        %728 = vmatpush.msra.mxu0 0.0
        %729 = vmatpush.msra.mxu0 0.0
        %730 = vmatpush.msra.mxu0 0.0
        %731 = vmatpush.msra.mxu0 0.0
        %732 = vmatpush.msra.mxu0 0.0
        %v733 = vand.u32 %v284, 4294901760
        %734 = vmatpush.msra.mxu0 %v733
        %v735 = vand.u32 %v283, 4294901760
        %736 = vmatpush.msra.mxu0 %v735
        %v737 = vand.u32 %v282, 4294901760
        %738 = vmatpush.msra.mxu0 %v737
        %v739 = vand.u32 %v281, 4294901760
        %740 = vmatpush.msra.mxu0 %v739
        %v741 = vand.u32 %v280, 4294901760
        %742 = vmatpush.msra.mxu0 %v741
        %v743 = vand.u32 %v279, 4294901760
        %744 = vmatpush.msra.mxu0 %v743
        %v745 = vand.u32 %v278, 4294901760
        %746 = vmatpush.msra.mxu0 %v745
        %v747 = vand.u32 %v277, 4294901760
        %748 = vmatpush.msra.mxu0 %v747
        %v749 = vand.u32 %v571, 4294901760
        %v750 = vsub.f32 %v571, %v749
        %v751 = vand.u32 %v750, 4294901760
        %752 = vmatmul.f32.gmra.mxu0 %v751
        %v753 = vpop.f32.mrf.mxu0
        %v754 = vadd.f32 %v718, %v753
        %v755 = vand.u32 %v574, 4294901760
        %v756 = vsub.f32 %v574, %v755
        %v757 = vand.u32 %v756, 4294901760
        %758 = vmatmul.f32.gmra.mxu0 %v757
        %v759 = vpop.f32.mrf.mxu0
        %v760 = vadd.f32 %v723, %v759
        %761 = vdwg.mxu0
        %762 = vmatpush.msra.mxu0 0.0
        %763 = vmatpush.msra.mxu0 0.0
        %764 = vmatpush.msra.mxu0 0.0
        %765 = vmatpush.msra.mxu0 0.0
        %766 = vmatpush.msra.mxu0 0.0
        %767 = vmatpush.msra.mxu0 0.0
        %768 = vmatpush.msra.mxu0 0.0
        %769 = vmatpush.msra.mxu0 0.0
        %v770 = vand.u32 %v284, 4294901760
        %v771 = vsub.f32 %v284, %v770
        %v772 = vand.u32 %v771, 4294901760
        %773 = vmatpush.msra.mxu0 %v772
        %v774 = vand.u32 %v283, 4294901760
        %v775 = vsub.f32 %v283, %v774
        %v776 = vand.u32 %v775, 4294901760
        %777 = vmatpush.msra.mxu0 %v776
        %v778 = vand.u32 %v282, 4294901760
        %v779 = vsub.f32 %v282, %v778
        %v780 = vand.u32 %v779, 4294901760
        %781 = vmatpush.msra.mxu0 %v780
        %v782 = vand.u32 %v281, 4294901760
        %v783 = vsub.f32 %v281, %v782
        %v784 = vand.u32 %v783, 4294901760
        %785 = vmatpush.msra.mxu0 %v784
        %v786 = vand.u32 %v280, 4294901760
        %v787 = vsub.f32 %v280, %v786
        %v788 = vand.u32 %v787, 4294901760
        %789 = vmatpush.msra.mxu0 %v788
        %v790 = vand.u32 %v279, 4294901760
        %v791 = vsub.f32 %v279, %v790
        %v792 = vand.u32 %v791, 4294901760
        %793 = vmatpush.msra.mxu0 %v792
        %v794 = vand.u32 %v278, 4294901760
        %v795 = vsub.f32 %v278, %v794
        %v796 = vand.u32 %v795, 4294901760
        %797 = vmatpush.msra.mxu0 %v796
        %v798 = vand.u32 %v277, 4294901760
        %v799 = vsub.f32 %v277, %v798
        %v800 = vand.u32 %v799, 4294901760
        %801 = vmatpush.msra.mxu0 %v800
        %v802 = vand.u32 %v571, 4294901760
        %803 = vmatmul.f32.gmra.mxu0 %v802
        %v804 = vpop.f32.mrf.mxu0
        %v805 = vadd.f32 %v754, %v804
        %v806 = vand.u32 %v574, 4294901760
        %807 = vmatmul.f32.gmra.mxu0 %v806
        %v808 = vpop.f32.mrf.mxu0
        %v809 = vadd.f32 %v760, %v808
        %810 = vdwg.mxu0
        %811 = vmatpush.msra.mxu0 0.0
        %812 = vmatpush.msra.mxu0 0.0
        %813 = vmatpush.msra.mxu0 0.0
        %814 = vmatpush.msra.mxu0 0.0
        %815 = vmatpush.msra.mxu0 0.0
        %816 = vmatpush.msra.mxu0 0.0
        %817 = vmatpush.msra.mxu0 0.0
        %818 = vmatpush.msra.mxu0 0.0
        %v819 = vand.u32 %v284, 4294901760
        %820 = vmatpush.msra.mxu0 %v819
        %v821 = vand.u32 %v283, 4294901760
        %822 = vmatpush.msra.mxu0 %v821
        %v823 = vand.u32 %v282, 4294901760
        %824 = vmatpush.msra.mxu0 %v823
        %v825 = vand.u32 %v281, 4294901760
        %826 = vmatpush.msra.mxu0 %v825
        %v827 = vand.u32 %v280, 4294901760
        %828 = vmatpush.msra.mxu0 %v827
        %v829 = vand.u32 %v279, 4294901760
        %830 = vmatpush.msra.mxu0 %v829
        %v831 = vand.u32 %v278, 4294901760
        %832 = vmatpush.msra.mxu0 %v831
        %v833 = vand.u32 %v277, 4294901760
        %834 = vmatpush.msra.mxu0 %v833
        %v835 = vand.u32 %v571, 4294901760
        %836 = vmatmul.f32.gmra.mxu0 %v835
        %v837 = vpop.f32.mrf.mxu0
        %v838 = vadd.f32 %v805, %v837
        %v839 = vand.u32 %v574, 4294901760
        %840 = vmatmul.f32.gmra.mxu0 %v839
        %v841 = vpop.f32.mrf.mxu0
        %v842 = vadd.f32 %v809, %v841
        %843 = vdwg.mxu0
        %v844 = vld [vmem:[#allocation2 + $0x2] sm:$0xff]
        %v845 = vld [vmem:[#allocation2 + $0xa] sm:$0xff]
        %s846 = scalar_lea.vmem [#allocation7], 128
        %v847 = vld [vmem:[%s846] sm:$0xff]
        %v848 = vld [vmem:[%s846 + $0x8] sm:$0xff]
        %v849 = vld [vmem:[%s846 + $0x10] sm:$0xff]
        %v850 = vld [vmem:[%s846 + $0x18] sm:$0xff]
        %v851 = vld [vmem:[%s846 + $0x20] sm:$0xff]
        %v852 = vld [vmem:[%s846 + $0x28] sm:$0xff]
        %v853 = vld [vmem:[%s846 + $0x30] sm:$0xff]
        %v854 = vld [vmem:[%s846 + $0x38] sm:$0xff]
        %v856 = vsel %vm272, %v844, 0
        %v859 = vsel %vm272, %v845, 0
        %861 = vmatpush.msra.mxu0 0.0
        %862 = vmatpush.msra.mxu0 0.0
        %863 = vmatpush.msra.mxu0 0.0
        %864 = vmatpush.msra.mxu0 0.0
        %865 = vmatpush.msra.mxu0 0.0
        %866 = vmatpush.msra.mxu0 0.0
        %867 = vmatpush.msra.mxu0 0.0
        %868 = vmatpush.msra.mxu0 0.0
        %v869 = vand.u32 %v854, 4294901760
        %870 = vmatpush.msra.mxu0 %v869
        %v871 = vand.u32 %v853, 4294901760
        %872 = vmatpush.msra.mxu0 %v871
        %v873 = vand.u32 %v852, 4294901760
        %874 = vmatpush.msra.mxu0 %v873
        %v875 = vand.u32 %v851, 4294901760
        %876 = vmatpush.msra.mxu0 %v875
        %v877 = vand.u32 %v850, 4294901760
        %878 = vmatpush.msra.mxu0 %v877
        %v879 = vand.u32 %v849, 4294901760
        %880 = vmatpush.msra.mxu0 %v879
        %v881 = vand.u32 %v848, 4294901760
        %882 = vmatpush.msra.mxu0 %v881
        %v883 = vand.u32 %v847, 4294901760
        %884 = vmatpush.msra.mxu0 %v883
        %v885 = vand.u32 %v856, 4294901760
        %v886 = vsub.f32 %v856, %v885
        %v887 = vand.u32 %v886, 4294901760
        %v888 = vsub.f32 %v886, %v887
        %v889 = vand.u32 %v888, 4294901760
        %890 = vmatmul.f32.gmra.mxu0 %v889
        %v891 = vpop.f32.mrf.mxu0
        %v892 = vadd.f32 0.0, %v891
        %v893 = vand.u32 %v859, 4294901760
        %v894 = vsub.f32 %v859, %v893
        %v895 = vand.u32 %v894, 4294901760
        %v896 = vsub.f32 %v894, %v895
        %v897 = vand.u32 %v896, 4294901760
        %898 = vmatmul.f32.gmra.mxu0 %v897
        %v899 = vpop.f32.mrf.mxu0
        %v900 = vadd.f32 0.0, %v899
        %901 = vdwg.mxu0
        %902 = vmatpush.msra.mxu0 0.0
        %903 = vmatpush.msra.mxu0 0.0
        %904 = vmatpush.msra.mxu0 0.0
        %905 = vmatpush.msra.mxu0 0.0
        %906 = vmatpush.msra.mxu0 0.0
        %907 = vmatpush.msra.mxu0 0.0
        %908 = vmatpush.msra.mxu0 0.0
        %909 = vmatpush.msra.mxu0 0.0
        %v910 = vand.u32 %v854, 4294901760
        %v911 = vsub.f32 %v854, %v910
        %v912 = vand.u32 %v911, 4294901760
        %v913 = vsub.f32 %v911, %v912
        %v914 = vand.u32 %v913, 4294901760
        %915 = vmatpush.msra.mxu0 %v914
        %v916 = vand.u32 %v853, 4294901760
        %v917 = vsub.f32 %v853, %v916
        %v918 = vand.u32 %v917, 4294901760
        %v919 = vsub.f32 %v917, %v918
        %v920 = vand.u32 %v919, 4294901760
        %921 = vmatpush.msra.mxu0 %v920
        %v922 = vand.u32 %v852, 4294901760
        %v923 = vsub.f32 %v852, %v922
        %v924 = vand.u32 %v923, 4294901760
        %v925 = vsub.f32 %v923, %v924
        %v926 = vand.u32 %v925, 4294901760
        %927 = vmatpush.msra.mxu0 %v926
        %v928 = vand.u32 %v851, 4294901760
        %v929 = vsub.f32 %v851, %v928
        %v930 = vand.u32 %v929, 4294901760
        %v931 = vsub.f32 %v929, %v930
        %v932 = vand.u32 %v931, 4294901760
        %933 = vmatpush.msra.mxu0 %v932
        %v934 = vand.u32 %v850, 4294901760
        %v935 = vsub.f32 %v850, %v934
        %v936 = vand.u32 %v935, 4294901760
        %v937 = vsub.f32 %v935, %v936
        %v938 = vand.u32 %v937, 4294901760
        %939 = vmatpush.msra.mxu0 %v938
        %v940 = vand.u32 %v849, 4294901760
        %v941 = vsub.f32 %v849, %v940
        %v942 = vand.u32 %v941, 4294901760
        %v943 = vsub.f32 %v941, %v942
        %v944 = vand.u32 %v943, 4294901760
        %945 = vmatpush.msra.mxu0 %v944
        %v946 = vand.u32 %v848, 4294901760
        %v947 = vsub.f32 %v848, %v946
        %v948 = vand.u32 %v947, 4294901760
        %v949 = vsub.f32 %v947, %v948
        %v950 = vand.u32 %v949, 4294901760
        %951 = vmatpush.msra.mxu0 %v950
        %v952 = vand.u32 %v847, 4294901760
        %v953 = vsub.f32 %v847, %v952
        %v954 = vand.u32 %v953, 4294901760
        %v955 = vsub.f32 %v953, %v954
        %v956 = vand.u32 %v955, 4294901760
        %957 = vmatpush.msra.mxu0 %v956
        %v958 = vand.u32 %v856, 4294901760
        %959 = vmatmul.f32.gmra.mxu0 %v958
        %v960 = vpop.f32.mrf.mxu0
        %v961 = vadd.f32 %v892, %v960
        %v962 = vand.u32 %v859, 4294901760
        %963 = vmatmul.f32.gmra.mxu0 %v962
        %v964 = vpop.f32.mrf.mxu0
        %v965 = vadd.f32 %v900, %v964
        %966 = vdwg.mxu0
        %967 = vmatpush.msra.mxu0 0.0
        %968 = vmatpush.msra.mxu0 0.0
        %969 = vmatpush.msra.mxu0 0.0
        %970 = vmatpush.msra.mxu0 0.0
        %971 = vmatpush.msra.mxu0 0.0
        %972 = vmatpush.msra.mxu0 0.0
        %973 = vmatpush.msra.mxu0 0.0
        %974 = vmatpush.msra.mxu0 0.0
        %v975 = vand.u32 %v854, 4294901760
        %v976 = vsub.f32 %v854, %v975
        %977 = vmatpush.msra.mxu0 %v976
        %v978 = vand.u32 %v853, 4294901760
        %v979 = vsub.f32 %v853, %v978
        %980 = vmatpush.msra.mxu0 %v979
        %v981 = vand.u32 %v852, 4294901760
        %v982 = vsub.f32 %v852, %v981
        %983 = vmatpush.msra.mxu0 %v982
        %v984 = vand.u32 %v851, 4294901760
        %v985 = vsub.f32 %v851, %v984
        %986 = vmatpush.msra.mxu0 %v985
        %v987 = vand.u32 %v850, 4294901760
        %v988 = vsub.f32 %v850, %v987
        %989 = vmatpush.msra.mxu0 %v988
        %v990 = vand.u32 %v849, 4294901760
        %v991 = vsub.f32 %v849, %v990
        %992 = vmatpush.msra.mxu0 %v991
        %v993 = vand.u32 %v848, 4294901760
        %v994 = vsub.f32 %v848, %v993
        %995 = vmatpush.msra.mxu0 %v994
        %v996 = vand.u32 %v847, 4294901760
        %v997 = vsub.f32 %v847, %v996
        %998 = vmatpush.msra.mxu0 %v997
        %v999 = vand.u32 %v856, 4294901760
        %v1000 = vsub.f32 %v856, %v999
        %1001 = vmatmul.f32.gmra.mxu0 %v1000
        %v1002 = vpop.f32.mrf.mxu0
        %v1003 = vadd.f32 %v961, %v1002
        %v1004 = vand.u32 %v859, 4294901760
        %v1005 = vsub.f32 %v859, %v1004
        %1006 = vmatmul.f32.gmra.mxu0 %v1005
        %v1007 = vpop.f32.mrf.mxu0
        %v1008 = vadd.f32 %v965, %v1007
        %1009 = vdwg.mxu0
        %1010 = vmatpush.msra.mxu0 0.0
        %1011 = vmatpush.msra.mxu0 0.0
        %1012 = vmatpush.msra.mxu0 0.0
        %1013 = vmatpush.msra.mxu0 0.0
        %1014 = vmatpush.msra.mxu0 0.0
        %1015 = vmatpush.msra.mxu0 0.0
        %1016 = vmatpush.msra.mxu0 0.0
        %1017 = vmatpush.msra.mxu0 0.0
        %v1018 = vand.u32 %v854, 4294901760
        %1019 = vmatpush.msra.mxu0 %v1018
        %v1020 = vand.u32 %v853, 4294901760
        %1021 = vmatpush.msra.mxu0 %v1020
        %v1022 = vand.u32 %v852, 4294901760
        %1023 = vmatpush.msra.mxu0 %v1022
        %v1024 = vand.u32 %v851, 4294901760
        %1025 = vmatpush.msra.mxu0 %v1024
        %v1026 = vand.u32 %v850, 4294901760
        %1027 = vmatpush.msra.mxu0 %v1026
        %v1028 = vand.u32 %v849, 4294901760
        %1029 = vmatpush.msra.mxu0 %v1028
        %v1030 = vand.u32 %v848, 4294901760
        %1031 = vmatpush.msra.mxu0 %v1030
        %v1032 = vand.u32 %v847, 4294901760
        %1033 = vmatpush.msra.mxu0 %v1032
        %v1034 = vand.u32 %v856, 4294901760
        %v1035 = vsub.f32 %v856, %v1034
        %v1036 = vand.u32 %v1035, 4294901760
        %1037 = vmatmul.f32.gmra.mxu0 %v1036
        %v1038 = vpop.f32.mrf.mxu0
        %v1039 = vadd.f32 %v1003, %v1038
        %v1040 = vand.u32 %v859, 4294901760
        %v1041 = vsub.f32 %v859, %v1040
        %v1042 = vand.u32 %v1041, 4294901760
        %1043 = vmatmul.f32.gmra.mxu0 %v1042
        %v1044 = vpop.f32.mrf.mxu0
        %v1045 = vadd.f32 %v1008, %v1044
        %1046 = vdwg.mxu0
        %1047 = vmatpush.msra.mxu0 0.0
        %1048 = vmatpush.msra.mxu0 0.0
        %1049 = vmatpush.msra.mxu0 0.0
        %1050 = vmatpush.msra.mxu0 0.0
        %1051 = vmatpush.msra.mxu0 0.0
        %1052 = vmatpush.msra.mxu0 0.0
        %1053 = vmatpush.msra.mxu0 0.0
        %1054 = vmatpush.msra.mxu0 0.0
        %v1055 = vand.u32 %v854, 4294901760
        %v1056 = vsub.f32 %v854, %v1055
        %v1057 = vand.u32 %v1056, 4294901760
        %1058 = vmatpush.msra.mxu0 %v1057
        %v1059 = vand.u32 %v853, 4294901760
        %v1060 = vsub.f32 %v853, %v1059
        %v1061 = vand.u32 %v1060, 4294901760
        %1062 = vmatpush.msra.mxu0 %v1061
        %v1063 = vand.u32 %v852, 4294901760
        %v1064 = vsub.f32 %v852, %v1063
        %v1065 = vand.u32 %v1064, 4294901760
        %1066 = vmatpush.msra.mxu0 %v1065
        %v1067 = vand.u32 %v851, 4294901760
        %v1068 = vsub.f32 %v851, %v1067
        %v1069 = vand.u32 %v1068, 4294901760
        %1070 = vmatpush.msra.mxu0 %v1069
        %v1071 = vand.u32 %v850, 4294901760
        %v1072 = vsub.f32 %v850, %v1071
        %v1073 = vand.u32 %v1072, 4294901760
        %1074 = vmatpush.msra.mxu0 %v1073
        %v1075 = vand.u32 %v849, 4294901760
        %v1076 = vsub.f32 %v849, %v1075
        %v1077 = vand.u32 %v1076, 4294901760
        %1078 = vmatpush.msra.mxu0 %v1077
        %v1079 = vand.u32 %v848, 4294901760
        %v1080 = vsub.f32 %v848, %v1079
        %v1081 = vand.u32 %v1080, 4294901760
        %1082 = vmatpush.msra.mxu0 %v1081
        %v1083 = vand.u32 %v847, 4294901760
        %v1084 = vsub.f32 %v847, %v1083
        %v1085 = vand.u32 %v1084, 4294901760
        %1086 = vmatpush.msra.mxu0 %v1085
        %v1087 = vand.u32 %v856, 4294901760
        %1088 = vmatmul.f32.gmra.mxu0 %v1087
        %v1089 = vpop.f32.mrf.mxu0
        %v1090 = vadd.f32 %v1039, %v1089
        %v1091 = vand.u32 %v859, 4294901760
        %1092 = vmatmul.f32.gmra.mxu0 %v1091
        %v1093 = vpop.f32.mrf.mxu0
        %v1094 = vadd.f32 %v1045, %v1093
        %1095 = vdwg.mxu0
        %1096 = vmatpush.msra.mxu0 0.0
        %1097 = vmatpush.msra.mxu0 0.0
        %1098 = vmatpush.msra.mxu0 0.0
        %1099 = vmatpush.msra.mxu0 0.0
        %1100 = vmatpush.msra.mxu0 0.0
        %1101 = vmatpush.msra.mxu0 0.0
        %1102 = vmatpush.msra.mxu0 0.0
        %1103 = vmatpush.msra.mxu0 0.0
        %v1104 = vand.u32 %v854, 4294901760
        %1105 = vmatpush.msra.mxu0 %v1104
        %v1106 = vand.u32 %v853, 4294901760
        %1107 = vmatpush.msra.mxu0 %v1106
        %v1108 = vand.u32 %v852, 4294901760
        %1109 = vmatpush.msra.mxu0 %v1108
        %v1110 = vand.u32 %v851, 4294901760
        %1111 = vmatpush.msra.mxu0 %v1110
        %v1112 = vand.u32 %v850, 4294901760
        %1113 = vmatpush.msra.mxu0 %v1112
        %v1114 = vand.u32 %v849, 4294901760
        %1115 = vmatpush.msra.mxu0 %v1114
        %v1116 = vand.u32 %v848, 4294901760
        %1117 = vmatpush.msra.mxu0 %v1116
        %v1118 = vand.u32 %v847, 4294901760
        %1119 = vmatpush.msra.mxu0 %v1118
        %v1120 = vand.u32 %v856, 4294901760
        %1121 = vmatmul.f32.gmra.mxu0 %v1120
        %v1122 = vpop.f32.mrf.mxu0
        %v1123 = vadd.f32 %v1090, %v1122
        %v1124 = vand.u32 %v859, 4294901760
        %1125 = vmatmul.f32.gmra.mxu0 %v1124
        %v1126 = vpop.f32.mrf.mxu0
        %v1127 = vadd.f32 %v1094, %v1126
        %1128 = vdwg.mxu0
        %v1129 = vadd.f32 %v838, %v1123
        %v1130 = vadd.f32 %v842, %v1127
        %v1131 = vperm.slane %v266, 0
        %v1132 = vadd.f32 %v1129, %v1131
        %v1133 = vadd.f32 %v1130, %v1131
        %v1134 = vmax.f32 %v1132, 0.0
        %v1135 = vmax.f32 %v1133, 0.0
        %v1136 = vperm.slane %v266, 1
        %v1137 = vmul.f32 %v1134, %v1136
        %v1138 = vmul.f32 %v1135, %v1136
        %v1139 = vperm.slane %v266, 2
        %v1140 = vadd.f32 %v1137, %v1139
        %v1141 = vadd.f32 %v1138, %v1139
        %1142 = vst [vmem:[#allocation3] sm:$0x3] 0.0
        %1143 = vst [vmem:[#allocation3 + $0x12] sm:$0x3] 0.0
        %1144 = vst [vmem:[#allocation3 + $0x2] sm:$0xff] %v1140
        %1145 = vst [vmem:[#allocation3 + $0xa] sm:$0xff] %v1141
        %v1146 = vld [vmem:[#allocation3] sm:$0xff]
        %v1147 = vld [vmem:[#allocation3 + $0x8] sm:$0xff]
        %v1148 = vld [vmem:[#allocation9] sm:$0xff]
        %v1149 = vld [vmem:[#allocation9 + $0x8] sm:$0xff]
        %v1150 = vld [vmem:[#allocation9 + $0x10] sm:$0xff]
        %v1151 = vld [vmem:[#allocation9 + $0x18] sm:$0xff]
        %v1152 = vld [vmem:[#allocation9 + $0x20] sm:$0xff]
        %v1153 = vld [vmem:[#allocation9 + $0x28] sm:$0xff]
        %v1154 = vld [vmem:[#allocation9 + $0x30] sm:$0xff]
        %v1155 = vld [vmem:[#allocation9 + $0x38] sm:$0xff]
        %v1156 = vld [vmem:[#allocation9 + $0x40] sm:$0xff]
        %v1157 = vld [vmem:[#allocation9 + $0x48] sm:$0xff]
        %v1158 = vld [vmem:[#allocation9 + $0x50] sm:$0xff]
        %v1159 = vld [vmem:[#allocation9 + $0x58] sm:$0xff]
        %v1160 = vld [vmem:[#allocation9 + $0x60] sm:$0xff]
        %v1161 = vld [vmem:[#allocation9 + $0x68] sm:$0xff]
        %v1162 = vld [vmem:[#allocation9 + $0x70] sm:$0xff]
        %v1163 = vld [vmem:[#allocation9 + $0x78] sm:$0xff]
        %v1164 = vld [vmem:[#allocation3 + $0x2] sm:$0xff]
        %v1165 = vld [vmem:[#allocation3 + $0xa] sm:$0xff]
        %s1166 = scalar_lea.vmem [#allocation9], 128
        %v1167 = vld [vmem:[%s1166] sm:$0xff]
        %v1168 = vld [vmem:[%s1166 + $0x8] sm:$0xff]
        %v1169 = vld [vmem:[%s1166 + $0x10] sm:$0xff]
        %v1170 = vld [vmem:[%s1166 + $0x18] sm:$0xff]
        %v1171 = vld [vmem:[%s1166 + $0x20] sm:$0xff]
        %v1172 = vld [vmem:[%s1166 + $0x28] sm:$0xff]
        %v1173 = vld [vmem:[%s1166 + $0x30] sm:$0xff]
        %v1174 = vld [vmem:[%s1166 + $0x38] sm:$0xff]
        %v1175 = vld [vmem:[%s1166 + $0x40] sm:$0xff]
        %v1176 = vld [vmem:[%s1166 + $0x48] sm:$0xff]
        %v1177 = vld [vmem:[%s1166 + $0x50] sm:$0xff]
        %v1178 = vld [vmem:[%s1166 + $0x58] sm:$0xff]
        %v1179 = vld [vmem:[%s1166 + $0x60] sm:$0xff]
        %v1180 = vld [vmem:[%s1166 + $0x68] sm:$0xff]
        %v1181 = vld [vmem:[%s1166 + $0x70] sm:$0xff]
        %v1182 = vld [vmem:[%s1166 + $0x78] sm:$0xff]
        %v1183 = vand.u32 %v1182, 4294901760
        %1184 = vmatpush.msra.mxu0 %v1183
        %v1185 = vand.u32 %v1181, 4294901760
        %1186 = vmatpush.msra.mxu0 %v1185
        %v1187 = vand.u32 %v1180, 4294901760
        %1188 = vmatpush.msra.mxu0 %v1187
        %v1189 = vand.u32 %v1179, 4294901760
        %1190 = vmatpush.msra.mxu0 %v1189
        %v1191 = vand.u32 %v1178, 4294901760
        %1192 = vmatpush.msra.mxu0 %v1191
        %v1193 = vand.u32 %v1177, 4294901760
        %1194 = vmatpush.msra.mxu0 %v1193
        %v1195 = vand.u32 %v1176, 4294901760
        %1196 = vmatpush.msra.mxu0 %v1195
        %v1197 = vand.u32 %v1175, 4294901760
        %1198 = vmatpush.msra.mxu0 %v1197
        %v1199 = vand.u32 %v1174, 4294901760
        %1200 = vmatpush.msra.mxu0 %v1199
        %v1201 = vand.u32 %v1173, 4294901760
        %1202 = vmatpush.msra.mxu0 %v1201
        %v1203 = vand.u32 %v1172, 4294901760
        %1204 = vmatpush.msra.mxu0 %v1203
        %v1205 = vand.u32 %v1171, 4294901760
        %1206 = vmatpush.msra.mxu0 %v1205
        %v1207 = vand.u32 %v1170, 4294901760
        %1208 = vmatpush.msra.mxu0 %v1207
        %v1209 = vand.u32 %v1169, 4294901760
        %1210 = vmatpush.msra.mxu0 %v1209
        %v1211 = vand.u32 %v1168, 4294901760
        %1212 = vmatpush.msra.mxu0 %v1211
        %v1213 = vand.u32 %v1167, 4294901760
        %1214 = vmatpush.msra.mxu0 %v1213
        %v1215 = vand.u32 %v1164, 4294901760
        %v1216 = vsub.f32 %v1164, %v1215
        %v1217 = vand.u32 %v1216, 4294901760
        %v1218 = vsub.f32 %v1216, %v1217
        %v1219 = vand.u32 %v1218, 4294901760
        %1220 = vmatmul.f32.gmra.mxu0 %v1219
        %v1221 = vpop.f32.mrf.mxu0
        %v1222 = vadd.f32 0.0, %v1221
        %v1223 = vand.u32 %v1165, 4294901760
        %v1224 = vsub.f32 %v1165, %v1223
        %v1225 = vand.u32 %v1224, 4294901760
        %v1226 = vsub.f32 %v1224, %v1225
        %v1227 = vand.u32 %v1226, 4294901760
        %1228 = vmatmul.f32.gmra.mxu0 %v1227
        %v1229 = vpop.f32.mrf.mxu0
        %v1230 = vadd.f32 0.0, %v1229
        %1231 = vdwg.mxu0
        %v1232 = vand.u32 %v1182, 4294901760
        %v1233 = vsub.f32 %v1182, %v1232
        %v1234 = vand.u32 %v1233, 4294901760
        %v1235 = vsub.f32 %v1233, %v1234
        %v1236 = vand.u32 %v1235, 4294901760
        %1237 = vmatpush.msra.mxu0 %v1236
        %v1238 = vand.u32 %v1181, 4294901760
        %v1239 = vsub.f32 %v1181, %v1238
        %v1240 = vand.u32 %v1239, 4294901760
        %v1241 = vsub.f32 %v1239, %v1240
        %v1242 = vand.u32 %v1241, 4294901760
        %1243 = vmatpush.msra.mxu0 %v1242
        %v1244 = vand.u32 %v1180, 4294901760
        %v1245 = vsub.f32 %v1180, %v1244
        %v1246 = vand.u32 %v1245, 4294901760
        %v1247 = vsub.f32 %v1245, %v1246
        %v1248 = vand.u32 %v1247, 4294901760
        %1249 = vmatpush.msra.mxu0 %v1248
        %v1250 = vand.u32 %v1179, 4294901760
        %v1251 = vsub.f32 %v1179, %v1250
        %v1252 = vand.u32 %v1251, 4294901760
        %v1253 = vsub.f32 %v1251, %v1252
        %v1254 = vand.u32 %v1253, 4294901760
        %1255 = vmatpush.msra.mxu0 %v1254
        %v1256 = vand.u32 %v1178, 4294901760
        %v1257 = vsub.f32 %v1178, %v1256
        %v1258 = vand.u32 %v1257, 4294901760
        %v1259 = vsub.f32 %v1257, %v1258
        %v1260 = vand.u32 %v1259, 4294901760
        %1261 = vmatpush.msra.mxu0 %v1260
        %v1262 = vand.u32 %v1177, 4294901760
        %v1263 = vsub.f32 %v1177, %v1262
        %v1264 = vand.u32 %v1263, 4294901760
        %v1265 = vsub.f32 %v1263, %v1264
        %v1266 = vand.u32 %v1265, 4294901760
        %1267 = vmatpush.msra.mxu0 %v1266
        %v1268 = vand.u32 %v1176, 4294901760
        %v1269 = vsub.f32 %v1176, %v1268
        %v1270 = vand.u32 %v1269, 4294901760
        %v1271 = vsub.f32 %v1269, %v1270
        %v1272 = vand.u32 %v1271, 4294901760
        %1273 = vmatpush.msra.mxu0 %v1272
        %v1274 = vand.u32 %v1175, 4294901760
        %v1275 = vsub.f32 %v1175, %v1274
        %v1276 = vand.u32 %v1275, 4294901760
        %v1277 = vsub.f32 %v1275, %v1276
        %v1278 = vand.u32 %v1277, 4294901760
        %1279 = vmatpush.msra.mxu0 %v1278
        %v1280 = vand.u32 %v1174, 4294901760
        %v1281 = vsub.f32 %v1174, %v1280
        %v1282 = vand.u32 %v1281, 4294901760
        %v1283 = vsub.f32 %v1281, %v1282
        %v1284 = vand.u32 %v1283, 4294901760
        %1285 = vmatpush.msra.mxu0 %v1284
        %v1286 = vand.u32 %v1173, 4294901760
        %v1287 = vsub.f32 %v1173, %v1286
        %v1288 = vand.u32 %v1287, 4294901760
        %v1289 = vsub.f32 %v1287, %v1288
        %v1290 = vand.u32 %v1289, 4294901760
        %1291 = vmatpush.msra.mxu0 %v1290
        %v1292 = vand.u32 %v1172, 4294901760
        %v1293 = vsub.f32 %v1172, %v1292
        %v1294 = vand.u32 %v1293, 4294901760
        %v1295 = vsub.f32 %v1293, %v1294
        %v1296 = vand.u32 %v1295, 4294901760
        %1297 = vmatpush.msra.mxu0 %v1296
        %v1298 = vand.u32 %v1171, 4294901760
        %v1299 = vsub.f32 %v1171, %v1298
        %v1300 = vand.u32 %v1299, 4294901760
        %v1301 = vsub.f32 %v1299, %v1300
        %v1302 = vand.u32 %v1301, 4294901760
        %1303 = vmatpush.msra.mxu0 %v1302
        %v1304 = vand.u32 %v1170, 4294901760
        %v1305 = vsub.f32 %v1170, %v1304
        %v1306 = vand.u32 %v1305, 4294901760
        %v1307 = vsub.f32 %v1305, %v1306
        %v1308 = vand.u32 %v1307, 4294901760
        %1309 = vmatpush.msra.mxu0 %v1308
        %v1310 = vand.u32 %v1169, 4294901760
        %v1311 = vsub.f32 %v1169, %v1310
        %v1312 = vand.u32 %v1311, 4294901760
        %v1313 = vsub.f32 %v1311, %v1312
        %v1314 = vand.u32 %v1313, 4294901760
        %1315 = vmatpush.msra.mxu0 %v1314
        %v1316 = vand.u32 %v1168, 4294901760
        %v1317 = vsub.f32 %v1168, %v1316
        %v1318 = vand.u32 %v1317, 4294901760
        %v1319 = vsub.f32 %v1317, %v1318
        %v1320 = vand.u32 %v1319, 4294901760
        %1321 = vmatpush.msra.mxu0 %v1320
        %v1322 = vand.u32 %v1167, 4294901760
        %v1323 = vsub.f32 %v1167, %v1322
        %v1324 = vand.u32 %v1323, 4294901760
        %v1325 = vsub.f32 %v1323, %v1324
        %v1326 = vand.u32 %v1325, 4294901760
        %1327 = vmatpush.msra.mxu0 %v1326
        %v1328 = vand.u32 %v1164, 4294901760
        %1329 = vmatmul.f32.gmra.mxu0 %v1328
        %v1330 = vpop.f32.mrf.mxu0
        %v1331 = vadd.f32 %v1222, %v1330
        %v1332 = vand.u32 %v1165, 4294901760
        %1333 = vmatmul.f32.gmra.mxu0 %v1332
        %v1334 = vpop.f32.mrf.mxu0
        %v1335 = vadd.f32 %v1230, %v1334
        %1336 = vdwg.mxu0
        %v1337 = vand.u32 %v1182, 4294901760
        %v1338 = vsub.f32 %v1182, %v1337
        %1339 = vmatpush.msra.mxu0 %v1338
        %v1340 = vand.u32 %v1181, 4294901760
        %v1341 = vsub.f32 %v1181, %v1340
        %1342 = vmatpush.msra.mxu0 %v1341
        %v1343 = vand.u32 %v1180, 4294901760
        %v1344 = vsub.f32 %v1180, %v1343
        %1345 = vmatpush.msra.mxu0 %v1344
        %v1346 = vand.u32 %v1179, 4294901760
        %v1347 = vsub.f32 %v1179, %v1346
        %1348 = vmatpush.msra.mxu0 %v1347
        %v1349 = vand.u32 %v1178, 4294901760
        %v1350 = vsub.f32 %v1178, %v1349
        %1351 = vmatpush.msra.mxu0 %v1350
        %v1352 = vand.u32 %v1177, 4294901760
        %v1353 = vsub.f32 %v1177, %v1352
        %1354 = vmatpush.msra.mxu0 %v1353
        %v1355 = vand.u32 %v1176, 4294901760
        %v1356 = vsub.f32 %v1176, %v1355
        %1357 = vmatpush.msra.mxu0 %v1356
        %v1358 = vand.u32 %v1175, 4294901760
        %v1359 = vsub.f32 %v1175, %v1358
        %1360 = vmatpush.msra.mxu0 %v1359
        %v1361 = vand.u32 %v1174, 4294901760
        %v1362 = vsub.f32 %v1174, %v1361
        %1363 = vmatpush.msra.mxu0 %v1362
        %v1364 = vand.u32 %v1173, 4294901760
        %v1365 = vsub.f32 %v1173, %v1364
        %1366 = vmatpush.msra.mxu0 %v1365
        %v1367 = vand.u32 %v1172, 4294901760
        %v1368 = vsub.f32 %v1172, %v1367
        %1369 = vmatpush.msra.mxu0 %v1368
        %v1370 = vand.u32 %v1171, 4294901760
        %v1371 = vsub.f32 %v1171, %v1370
        %1372 = vmatpush.msra.mxu0 %v1371
        %v1373 = vand.u32 %v1170, 4294901760
        %v1374 = vsub.f32 %v1170, %v1373
        %1375 = vmatpush.msra.mxu0 %v1374
        %v1376 = vand.u32 %v1169, 4294901760
        %v1377 = vsub.f32 %v1169, %v1376
        %1378 = vmatpush.msra.mxu0 %v1377
        %v1379 = vand.u32 %v1168, 4294901760
        %v1380 = vsub.f32 %v1168, %v1379
        %1381 = vmatpush.msra.mxu0 %v1380
        %v1382 = vand.u32 %v1167, 4294901760
        %v1383 = vsub.f32 %v1167, %v1382
        %1384 = vmatpush.msra.mxu0 %v1383
        %v1385 = vand.u32 %v1164, 4294901760
        %v1386 = vsub.f32 %v1164, %v1385
        %1387 = vmatmul.f32.gmra.mxu0 %v1386
        %v1388 = vpop.f32.mrf.mxu0
        %v1389 = vadd.f32 %v1331, %v1388
        %v1390 = vand.u32 %v1165, 4294901760
        %v1391 = vsub.f32 %v1165, %v1390
        %1392 = vmatmul.f32.gmra.mxu0 %v1391
        %v1393 = vpop.f32.mrf.mxu0
        %v1394 = vadd.f32 %v1335, %v1393
        %1395 = vdwg.mxu0
        %v1396 = vand.u32 %v1182, 4294901760
        %1397 = vmatpush.msra.mxu0 %v1396
        %v1398 = vand.u32 %v1181, 4294901760
        %1399 = vmatpush.msra.mxu0 %v1398
        %v1400 = vand.u32 %v1180, 4294901760
        %1401 = vmatpush.msra.mxu0 %v1400
        %v1402 = vand.u32 %v1179, 4294901760
        %1403 = vmatpush.msra.mxu0 %v1402
        %v1404 = vand.u32 %v1178, 4294901760
        %1405 = vmatpush.msra.mxu0 %v1404
        %v1406 = vand.u32 %v1177, 4294901760
        %1407 = vmatpush.msra.mxu0 %v1406
        %v1408 = vand.u32 %v1176, 4294901760
        %1409 = vmatpush.msra.mxu0 %v1408
        %v1410 = vand.u32 %v1175, 4294901760
        %1411 = vmatpush.msra.mxu0 %v1410
        %v1412 = vand.u32 %v1174, 4294901760
        %1413 = vmatpush.msra.mxu0 %v1412
        %v1414 = vand.u32 %v1173, 4294901760
        %1415 = vmatpush.msra.mxu0 %v1414
        %v1416 = vand.u32 %v1172, 4294901760
        %1417 = vmatpush.msra.mxu0 %v1416
        %v1418 = vand.u32 %v1171, 4294901760
        %1419 = vmatpush.msra.mxu0 %v1418
        %v1420 = vand.u32 %v1170, 4294901760
        %1421 = vmatpush.msra.mxu0 %v1420
        %v1422 = vand.u32 %v1169, 4294901760
        %1423 = vmatpush.msra.mxu0 %v1422
        %v1424 = vand.u32 %v1168, 4294901760
        %1425 = vmatpush.msra.mxu0 %v1424
        %v1426 = vand.u32 %v1167, 4294901760
        %1427 = vmatpush.msra.mxu0 %v1426
        %v1428 = vand.u32 %v1164, 4294901760
        %v1429 = vsub.f32 %v1164, %v1428
        %v1430 = vand.u32 %v1429, 4294901760
        %1431 = vmatmul.f32.gmra.mxu0 %v1430
        %v1432 = vpop.f32.mrf.mxu0
        %v1433 = vadd.f32 %v1389, %v1432
        %v1434 = vand.u32 %v1165, 4294901760
        %v1435 = vsub.f32 %v1165, %v1434
        %v1436 = vand.u32 %v1435, 4294901760
        %1437 = vmatmul.f32.gmra.mxu0 %v1436
        %v1438 = vpop.f32.mrf.mxu0
        %v1439 = vadd.f32 %v1394, %v1438
        %1440 = vdwg.mxu0
        %v1441 = vand.u32 %v1182, 4294901760
        %v1442 = vsub.f32 %v1182, %v1441
        %v1443 = vand.u32 %v1442, 4294901760
        %1444 = vmatpush.msra.mxu0 %v1443
        %v1445 = vand.u32 %v1181, 4294901760
        %v1446 = vsub.f32 %v1181, %v1445
        %v1447 = vand.u32 %v1446, 4294901760
        %1448 = vmatpush.msra.mxu0 %v1447
        %v1449 = vand.u32 %v1180, 4294901760
        %v1450 = vsub.f32 %v1180, %v1449
        %v1451 = vand.u32 %v1450, 4294901760
        %1452 = vmatpush.msra.mxu0 %v1451
        %v1453 = vand.u32 %v1179, 4294901760
        %v1454 = vsub.f32 %v1179, %v1453
        %v1455 = vand.u32 %v1454, 4294901760
        %1456 = vmatpush.msra.mxu0 %v1455
        %v1457 = vand.u32 %v1178, 4294901760
        %v1458 = vsub.f32 %v1178, %v1457
        %v1459 = vand.u32 %v1458, 4294901760
        %1460 = vmatpush.msra.mxu0 %v1459
        %v1461 = vand.u32 %v1177, 4294901760
        %v1462 = vsub.f32 %v1177, %v1461
        %v1463 = vand.u32 %v1462, 4294901760
        %1464 = vmatpush.msra.mxu0 %v1463
        %v1465 = vand.u32 %v1176, 4294901760
        %v1466 = vsub.f32 %v1176, %v1465
        %v1467 = vand.u32 %v1466, 4294901760
        %1468 = vmatpush.msra.mxu0 %v1467
        %v1469 = vand.u32 %v1175, 4294901760
        %v1470 = vsub.f32 %v1175, %v1469
        %v1471 = vand.u32 %v1470, 4294901760
        %1472 = vmatpush.msra.mxu0 %v1471
        %v1473 = vand.u32 %v1174, 4294901760
        %v1474 = vsub.f32 %v1174, %v1473
        %v1475 = vand.u32 %v1474, 4294901760
        %1476 = vmatpush.msra.mxu0 %v1475
        %v1477 = vand.u32 %v1173, 4294901760
        %v1478 = vsub.f32 %v1173, %v1477
        %v1479 = vand.u32 %v1478, 4294901760
        %1480 = vmatpush.msra.mxu0 %v1479
        %v1481 = vand.u32 %v1172, 4294901760
        %v1482 = vsub.f32 %v1172, %v1481
        %v1483 = vand.u32 %v1482, 4294901760
        %1484 = vmatpush.msra.mxu0 %v1483
        %v1485 = vand.u32 %v1171, 4294901760
        %v1486 = vsub.f32 %v1171, %v1485
        %v1487 = vand.u32 %v1486, 4294901760
        %1488 = vmatpush.msra.mxu0 %v1487
        %v1489 = vand.u32 %v1170, 4294901760
        %v1490 = vsub.f32 %v1170, %v1489
        %v1491 = vand.u32 %v1490, 4294901760
        %1492 = vmatpush.msra.mxu0 %v1491
        %v1493 = vand.u32 %v1169, 4294901760
        %v1494 = vsub.f32 %v1169, %v1493
        %v1495 = vand.u32 %v1494, 4294901760
        %1496 = vmatpush.msra.mxu0 %v1495
        %v1497 = vand.u32 %v1168, 4294901760
        %v1498 = vsub.f32 %v1168, %v1497
        %v1499 = vand.u32 %v1498, 4294901760
        %1500 = vmatpush.msra.mxu0 %v1499
        %v1501 = vand.u32 %v1167, 4294901760
        %v1502 = vsub.f32 %v1167, %v1501
        %v1503 = vand.u32 %v1502, 4294901760
        %1504 = vmatpush.msra.mxu0 %v1503
        %v1505 = vand.u32 %v1164, 4294901760
        %1506 = vmatmul.f32.gmra.mxu0 %v1505
        %v1507 = vpop.f32.mrf.mxu0
        %v1508 = vadd.f32 %v1433, %v1507
        %v1509 = vand.u32 %v1165, 4294901760
        %1510 = vmatmul.f32.gmra.mxu0 %v1509
        %v1511 = vpop.f32.mrf.mxu0
        %v1512 = vadd.f32 %v1439, %v1511
        %1513 = vdwg.mxu0
        %v1514 = vand.u32 %v1182, 4294901760
        %1515 = vmatpush.msra.mxu0 %v1514
        %v1516 = vand.u32 %v1181, 4294901760
        %1517 = vmatpush.msra.mxu0 %v1516
        %v1518 = vand.u32 %v1180, 4294901760
        %1519 = vmatpush.msra.mxu0 %v1518
        %v1520 = vand.u32 %v1179, 4294901760
        %1521 = vmatpush.msra.mxu0 %v1520
        %v1522 = vand.u32 %v1178, 4294901760
        %1523 = vmatpush.msra.mxu0 %v1522
        %v1524 = vand.u32 %v1177, 4294901760
        %1525 = vmatpush.msra.mxu0 %v1524
        %v1526 = vand.u32 %v1176, 4294901760
        %1527 = vmatpush.msra.mxu0 %v1526
        %v1528 = vand.u32 %v1175, 4294901760
        %1529 = vmatpush.msra.mxu0 %v1528
        %v1530 = vand.u32 %v1174, 4294901760
        %1531 = vmatpush.msra.mxu0 %v1530
        %v1532 = vand.u32 %v1173, 4294901760
        %1533 = vmatpush.msra.mxu0 %v1532
        %v1534 = vand.u32 %v1172, 4294901760
        %1535 = vmatpush.msra.mxu0 %v1534
        %v1536 = vand.u32 %v1171, 4294901760
        %1537 = vmatpush.msra.mxu0 %v1536
        %v1538 = vand.u32 %v1170, 4294901760
        %1539 = vmatpush.msra.mxu0 %v1538
        %v1540 = vand.u32 %v1169, 4294901760
        %1541 = vmatpush.msra.mxu0 %v1540
        %v1542 = vand.u32 %v1168, 4294901760
        %1543 = vmatpush.msra.mxu0 %v1542
        %v1544 = vand.u32 %v1167, 4294901760
        %1545 = vmatpush.msra.mxu0 %v1544
        %v1546 = vand.u32 %v1164, 4294901760
        %1547 = vmatmul.f32.gmra.mxu0 %v1546
        %v1548 = vpop.f32.mrf.mxu0
        %v1549 = vadd.f32 %v1508, %v1548
        %v1550 = vand.u32 %v1165, 4294901760
        %1551 = vmatmul.f32.gmra.mxu0 %v1550
        %v1552 = vpop.f32.mrf.mxu0
        %v1553 = vadd.f32 %v1512, %v1552
        %1554 = vdwg.mxu0
        %v1555 = vand.u32 %v1163, 4294901760
        %1556 = vmatpush.msra.mxu0 %v1555
        %v1557 = vand.u32 %v1162, 4294901760
        %1558 = vmatpush.msra.mxu0 %v1557
        %v1559 = vand.u32 %v1161, 4294901760
        %1560 = vmatpush.msra.mxu0 %v1559
        %v1561 = vand.u32 %v1160, 4294901760
        %1562 = vmatpush.msra.mxu0 %v1561
        %v1563 = vand.u32 %v1159, 4294901760
        %1564 = vmatpush.msra.mxu0 %v1563
        %v1565 = vand.u32 %v1158, 4294901760
        %1566 = vmatpush.msra.mxu0 %v1565
        %v1567 = vand.u32 %v1157, 4294901760
        %1568 = vmatpush.msra.mxu0 %v1567
        %v1569 = vand.u32 %v1156, 4294901760
        %1570 = vmatpush.msra.mxu0 %v1569
        %v1571 = vand.u32 %v1155, 4294901760
        %1572 = vmatpush.msra.mxu0 %v1571
        %v1573 = vand.u32 %v1154, 4294901760
        %1574 = vmatpush.msra.mxu0 %v1573
        %v1575 = vand.u32 %v1153, 4294901760
        %1576 = vmatpush.msra.mxu0 %v1575
        %v1577 = vand.u32 %v1152, 4294901760
        %1578 = vmatpush.msra.mxu0 %v1577
        %v1579 = vand.u32 %v1151, 4294901760
        %1580 = vmatpush.msra.mxu0 %v1579
        %v1581 = vand.u32 %v1150, 4294901760
        %1582 = vmatpush.msra.mxu0 %v1581
        %v1583 = vand.u32 %v1149, 4294901760
        %1584 = vmatpush.msra.mxu0 %v1583
        %v1585 = vand.u32 %v1148, 4294901760
        %1586 = vmatpush.msra.mxu0 %v1585
        %v1587 = vand.u32 %v1146, 4294901760
        %v1588 = vsub.f32 %v1146, %v1587
        %v1589 = vand.u32 %v1588, 4294901760
        %v1590 = vsub.f32 %v1588, %v1589
        %v1591 = vand.u32 %v1590, 4294901760
        %1592 = vmatmul.f32.gmra.mxu0 %v1591
        %v1593 = vpop.f32.mrf.mxu0
        %v1594 = vadd.f32 %v1549, %v1593
        %v1595 = vand.u32 %v1147, 4294901760
        %v1596 = vsub.f32 %v1147, %v1595
        %v1597 = vand.u32 %v1596, 4294901760
        %v1598 = vsub.f32 %v1596, %v1597
        %v1599 = vand.u32 %v1598, 4294901760
        %1600 = vmatmul.f32.gmra.mxu0 %v1599
        %v1601 = vpop.f32.mrf.mxu0
        %v1602 = vadd.f32 %v1553, %v1601
        %1603 = vdwg.mxu0
        %v1604 = vand.u32 %v1163, 4294901760
        %v1605 = vsub.f32 %v1163, %v1604
        %v1606 = vand.u32 %v1605, 4294901760
        %v1607 = vsub.f32 %v1605, %v1606
        %v1608 = vand.u32 %v1607, 4294901760
        %1609 = vmatpush.msra.mxu0 %v1608
        %v1610 = vand.u32 %v1162, 4294901760
        %v1611 = vsub.f32 %v1162, %v1610
        %v1612 = vand.u32 %v1611, 4294901760
        %v1613 = vsub.f32 %v1611, %v1612
        %v1614 = vand.u32 %v1613, 4294901760
        %1615 = vmatpush.msra.mxu0 %v1614
        %v1616 = vand.u32 %v1161, 4294901760
        %v1617 = vsub.f32 %v1161, %v1616
        %v1618 = vand.u32 %v1617, 4294901760
        %v1619 = vsub.f32 %v1617, %v1618
        %v1620 = vand.u32 %v1619, 4294901760
        %1621 = vmatpush.msra.mxu0 %v1620
        %v1622 = vand.u32 %v1160, 4294901760
        %v1623 = vsub.f32 %v1160, %v1622
        %v1624 = vand.u32 %v1623, 4294901760
        %v1625 = vsub.f32 %v1623, %v1624
        %v1626 = vand.u32 %v1625, 4294901760
        %1627 = vmatpush.msra.mxu0 %v1626
        %v1628 = vand.u32 %v1159, 4294901760
        %v1629 = vsub.f32 %v1159, %v1628
        %v1630 = vand.u32 %v1629, 4294901760
        %v1631 = vsub.f32 %v1629, %v1630
        %v1632 = vand.u32 %v1631, 4294901760
        %1633 = vmatpush.msra.mxu0 %v1632
        %v1634 = vand.u32 %v1158, 4294901760
        %v1635 = vsub.f32 %v1158, %v1634
        %v1636 = vand.u32 %v1635, 4294901760
        %v1637 = vsub.f32 %v1635, %v1636
        %v1638 = vand.u32 %v1637, 4294901760
        %1639 = vmatpush.msra.mxu0 %v1638
        %v1640 = vand.u32 %v1157, 4294901760
        %v1641 = vsub.f32 %v1157, %v1640
        %v1642 = vand.u32 %v1641, 4294901760
        %v1643 = vsub.f32 %v1641, %v1642
        %v1644 = vand.u32 %v1643, 4294901760
        %1645 = vmatpush.msra.mxu0 %v1644
        %v1646 = vand.u32 %v1156, 4294901760
        %v1647 = vsub.f32 %v1156, %v1646
        %v1648 = vand.u32 %v1647, 4294901760
        %v1649 = vsub.f32 %v1647, %v1648
        %v1650 = vand.u32 %v1649, 4294901760
        %1651 = vmatpush.msra.mxu0 %v1650
        %v1652 = vand.u32 %v1155, 4294901760
        %v1653 = vsub.f32 %v1155, %v1652
        %v1654 = vand.u32 %v1653, 4294901760
        %v1655 = vsub.f32 %v1653, %v1654
        %v1656 = vand.u32 %v1655, 4294901760
        %1657 = vmatpush.msra.mxu0 %v1656
        %v1658 = vand.u32 %v1154, 4294901760
        %v1659 = vsub.f32 %v1154, %v1658
        %v1660 = vand.u32 %v1659, 4294901760
        %v1661 = vsub.f32 %v1659, %v1660
        %v1662 = vand.u32 %v1661, 4294901760
        %1663 = vmatpush.msra.mxu0 %v1662
        %v1664 = vand.u32 %v1153, 4294901760
        %v1665 = vsub.f32 %v1153, %v1664
        %v1666 = vand.u32 %v1665, 4294901760
        %v1667 = vsub.f32 %v1665, %v1666
        %v1668 = vand.u32 %v1667, 4294901760
        %1669 = vmatpush.msra.mxu0 %v1668
        %v1670 = vand.u32 %v1152, 4294901760
        %v1671 = vsub.f32 %v1152, %v1670
        %v1672 = vand.u32 %v1671, 4294901760
        %v1673 = vsub.f32 %v1671, %v1672
        %v1674 = vand.u32 %v1673, 4294901760
        %1675 = vmatpush.msra.mxu0 %v1674
        %v1676 = vand.u32 %v1151, 4294901760
        %v1677 = vsub.f32 %v1151, %v1676
        %v1678 = vand.u32 %v1677, 4294901760
        %v1679 = vsub.f32 %v1677, %v1678
        %v1680 = vand.u32 %v1679, 4294901760
        %1681 = vmatpush.msra.mxu0 %v1680
        %v1682 = vand.u32 %v1150, 4294901760
        %v1683 = vsub.f32 %v1150, %v1682
        %v1684 = vand.u32 %v1683, 4294901760
        %v1685 = vsub.f32 %v1683, %v1684
        %v1686 = vand.u32 %v1685, 4294901760
        %1687 = vmatpush.msra.mxu0 %v1686
        %v1688 = vand.u32 %v1149, 4294901760
        %v1689 = vsub.f32 %v1149, %v1688
        %v1690 = vand.u32 %v1689, 4294901760
        %v1691 = vsub.f32 %v1689, %v1690
        %v1692 = vand.u32 %v1691, 4294901760
        %1693 = vmatpush.msra.mxu0 %v1692
        %v1694 = vand.u32 %v1148, 4294901760
        %v1695 = vsub.f32 %v1148, %v1694
        %v1696 = vand.u32 %v1695, 4294901760
        %v1697 = vsub.f32 %v1695, %v1696
        %v1698 = vand.u32 %v1697, 4294901760
        %1699 = vmatpush.msra.mxu0 %v1698
        %v1700 = vand.u32 %v1146, 4294901760
        %1701 = vmatmul.f32.gmra.mxu0 %v1700
        %v1702 = vpop.f32.mrf.mxu0
        %v1703 = vadd.f32 %v1594, %v1702
        %v1704 = vand.u32 %v1147, 4294901760
        %1705 = vmatmul.f32.gmra.mxu0 %v1704
        %v1706 = vpop.f32.mrf.mxu0
        %v1707 = vadd.f32 %v1602, %v1706
        %1708 = vdwg.mxu0
        %v1709 = vand.u32 %v1163, 4294901760
        %v1710 = vsub.f32 %v1163, %v1709
        %1711 = vmatpush.msra.mxu0 %v1710
        %v1712 = vand.u32 %v1162, 4294901760
        %v1713 = vsub.f32 %v1162, %v1712
        %1714 = vmatpush.msra.mxu0 %v1713
        %v1715 = vand.u32 %v1161, 4294901760
        %v1716 = vsub.f32 %v1161, %v1715
        %1717 = vmatpush.msra.mxu0 %v1716
        %v1718 = vand.u32 %v1160, 4294901760
        %v1719 = vsub.f32 %v1160, %v1718
        %1720 = vmatpush.msra.mxu0 %v1719
        %v1721 = vand.u32 %v1159, 4294901760
        %v1722 = vsub.f32 %v1159, %v1721
        %1723 = vmatpush.msra.mxu0 %v1722
        %v1724 = vand.u32 %v1158, 4294901760
        %v1725 = vsub.f32 %v1158, %v1724
        %1726 = vmatpush.msra.mxu0 %v1725
        %v1727 = vand.u32 %v1157, 4294901760
        %v1728 = vsub.f32 %v1157, %v1727
        %1729 = vmatpush.msra.mxu0 %v1728
        %v1730 = vand.u32 %v1156, 4294901760
        %v1731 = vsub.f32 %v1156, %v1730
        %1732 = vmatpush.msra.mxu0 %v1731
        %v1733 = vand.u32 %v1155, 4294901760
        %v1734 = vsub.f32 %v1155, %v1733
        %1735 = vmatpush.msra.mxu0 %v1734
        %v1736 = vand.u32 %v1154, 4294901760
        %v1737 = vsub.f32 %v1154, %v1736
        %1738 = vmatpush.msra.mxu0 %v1737
        %v1739 = vand.u32 %v1153, 4294901760
        %v1740 = vsub.f32 %v1153, %v1739
        %1741 = vmatpush.msra.mxu0 %v1740
        %v1742 = vand.u32 %v1152, 4294901760
        %v1743 = vsub.f32 %v1152, %v1742
        %1744 = vmatpush.msra.mxu0 %v1743
        %v1745 = vand.u32 %v1151, 4294901760
        %v1746 = vsub.f32 %v1151, %v1745
        %1747 = vmatpush.msra.mxu0 %v1746
        %v1748 = vand.u32 %v1150, 4294901760
        %v1749 = vsub.f32 %v1150, %v1748
        %1750 = vmatpush.msra.mxu0 %v1749
        %v1751 = vand.u32 %v1149, 4294901760
        %v1752 = vsub.f32 %v1149, %v1751
        %1753 = vmatpush.msra.mxu0 %v1752
        %v1754 = vand.u32 %v1148, 4294901760
        %v1755 = vsub.f32 %v1148, %v1754
        %1756 = vmatpush.msra.mxu0 %v1755
        %v1757 = vand.u32 %v1146, 4294901760
        %v1758 = vsub.f32 %v1146, %v1757
        %1759 = vmatmul.f32.gmra.mxu0 %v1758
        %v1760 = vpop.f32.mrf.mxu0
        %v1761 = vadd.f32 %v1703, %v1760
        %v1762 = vand.u32 %v1147, 4294901760
        %v1763 = vsub.f32 %v1147, %v1762
        %1764 = vmatmul.f32.gmra.mxu0 %v1763
        %v1765 = vpop.f32.mrf.mxu0
        %v1766 = vadd.f32 %v1707, %v1765
        %1767 = vdwg.mxu0
        %v1768 = vand.u32 %v1163, 4294901760
        %1769 = vmatpush.msra.mxu0 %v1768
        %v1770 = vand.u32 %v1162, 4294901760
        %1771 = vmatpush.msra.mxu0 %v1770
        %v1772 = vand.u32 %v1161, 4294901760
        %1773 = vmatpush.msra.mxu0 %v1772
        %v1774 = vand.u32 %v1160, 4294901760
        %1775 = vmatpush.msra.mxu0 %v1774
        %v1776 = vand.u32 %v1159, 4294901760
        %1777 = vmatpush.msra.mxu0 %v1776
        %v1778 = vand.u32 %v1158, 4294901760
        %1779 = vmatpush.msra.mxu0 %v1778
        %v1780 = vand.u32 %v1157, 4294901760
        %1781 = vmatpush.msra.mxu0 %v1780
        %v1782 = vand.u32 %v1156, 4294901760
        %1783 = vmatpush.msra.mxu0 %v1782
        %v1784 = vand.u32 %v1155, 4294901760
        %1785 = vmatpush.msra.mxu0 %v1784
        %v1786 = vand.u32 %v1154, 4294901760
        %1787 = vmatpush.msra.mxu0 %v1786
        %v1788 = vand.u32 %v1153, 4294901760
        %1789 = vmatpush.msra.mxu0 %v1788
        %v1790 = vand.u32 %v1152, 4294901760
        %1791 = vmatpush.msra.mxu0 %v1790
        %v1792 = vand.u32 %v1151, 4294901760
        %1793 = vmatpush.msra.mxu0 %v1792
        %v1794 = vand.u32 %v1150, 4294901760
        %1795 = vmatpush.msra.mxu0 %v1794
        %v1796 = vand.u32 %v1149, 4294901760
        %1797 = vmatpush.msra.mxu0 %v1796
        %v1798 = vand.u32 %v1148, 4294901760
        %1799 = vmatpush.msra.mxu0 %v1798
        %v1800 = vand.u32 %v1146, 4294901760
        %v1801 = vsub.f32 %v1146, %v1800
        %v1802 = vand.u32 %v1801, 4294901760
        %1803 = vmatmul.f32.gmra.mxu0 %v1802
        %v1804 = vpop.f32.mrf.mxu0
        %v1805 = vadd.f32 %v1761, %v1804
        %v1806 = vand.u32 %v1147, 4294901760
        %v1807 = vsub.f32 %v1147, %v1806
        %v1808 = vand.u32 %v1807, 4294901760
        %1809 = vmatmul.f32.gmra.mxu0 %v1808
        %v1810 = vpop.f32.mrf.mxu0
        %v1811 = vadd.f32 %v1766, %v1810
        %1812 = vdwg.mxu0
        %v1813 = vand.u32 %v1163, 4294901760
        %v1814 = vsub.f32 %v1163, %v1813
        %v1815 = vand.u32 %v1814, 4294901760
        %1816 = vmatpush.msra.mxu0 %v1815
        %v1817 = vand.u32 %v1162, 4294901760
        %v1818 = vsub.f32 %v1162, %v1817
        %v1819 = vand.u32 %v1818, 4294901760
        %1820 = vmatpush.msra.mxu0 %v1819
        %v1821 = vand.u32 %v1161, 4294901760
        %v1822 = vsub.f32 %v1161, %v1821
        %v1823 = vand.u32 %v1822, 4294901760
        %1824 = vmatpush.msra.mxu0 %v1823
        %v1825 = vand.u32 %v1160, 4294901760
        %v1826 = vsub.f32 %v1160, %v1825
        %v1827 = vand.u32 %v1826, 4294901760
        %1828 = vmatpush.msra.mxu0 %v1827
        %v1829 = vand.u32 %v1159, 4294901760
        %v1830 = vsub.f32 %v1159, %v1829
        %v1831 = vand.u32 %v1830, 4294901760
        %1832 = vmatpush.msra.mxu0 %v1831
        %v1833 = vand.u32 %v1158, 4294901760
        %v1834 = vsub.f32 %v1158, %v1833
        %v1835 = vand.u32 %v1834, 4294901760
        %1836 = vmatpush.msra.mxu0 %v1835
        %v1837 = vand.u32 %v1157, 4294901760
        %v1838 = vsub.f32 %v1157, %v1837
        %v1839 = vand.u32 %v1838, 4294901760
        %1840 = vmatpush.msra.mxu0 %v1839
        %v1841 = vand.u32 %v1156, 4294901760
        %v1842 = vsub.f32 %v1156, %v1841
        %v1843 = vand.u32 %v1842, 4294901760
        %1844 = vmatpush.msra.mxu0 %v1843
        %v1845 = vand.u32 %v1155, 4294901760
        %v1846 = vsub.f32 %v1155, %v1845
        %v1847 = vand.u32 %v1846, 4294901760
        %1848 = vmatpush.msra.mxu0 %v1847
        %v1849 = vand.u32 %v1154, 4294901760
        %v1850 = vsub.f32 %v1154, %v1849
        %v1851 = vand.u32 %v1850, 4294901760
        %1852 = vmatpush.msra.mxu0 %v1851
        %v1853 = vand.u32 %v1153, 4294901760
        %v1854 = vsub.f32 %v1153, %v1853
        %v1855 = vand.u32 %v1854, 4294901760
        %1856 = vmatpush.msra.mxu0 %v1855
        %v1857 = vand.u32 %v1152, 4294901760
        %v1858 = vsub.f32 %v1152, %v1857
        %v1859 = vand.u32 %v1858, 4294901760
        %1860 = vmatpush.msra.mxu0 %v1859
        %v1861 = vand.u32 %v1151, 4294901760
        %v1862 = vsub.f32 %v1151, %v1861
        %v1863 = vand.u32 %v1862, 4294901760
        %1864 = vmatpush.msra.mxu0 %v1863
        %v1865 = vand.u32 %v1150, 4294901760
        %v1866 = vsub.f32 %v1150, %v1865
        %v1867 = vand.u32 %v1866, 4294901760
        %1868 = vmatpush.msra.mxu0 %v1867
        %v1869 = vand.u32 %v1149, 4294901760
        %v1870 = vsub.f32 %v1149, %v1869
        %v1871 = vand.u32 %v1870, 4294901760
        %1872 = vmatpush.msra.mxu0 %v1871
        %v1873 = vand.u32 %v1148, 4294901760
        %v1874 = vsub.f32 %v1148, %v1873
        %v1875 = vand.u32 %v1874, 4294901760
        %1876 = vmatpush.msra.mxu0 %v1875
        %v1877 = vand.u32 %v1146, 4294901760
        %1878 = vmatmul.f32.gmra.mxu0 %v1877
        %v1879 = vpop.f32.mrf.mxu0
        %v1880 = vadd.f32 %v1805, %v1879
        %v1881 = vand.u32 %v1147, 4294901760
        %1882 = vmatmul.f32.gmra.mxu0 %v1881
        %v1883 = vpop.f32.mrf.mxu0
        %v1884 = vadd.f32 %v1811, %v1883
        %1885 = vdwg.mxu0
        %v1886 = vand.u32 %v1163, 4294901760
        %1887 = vmatpush.msra.mxu0 %v1886
        %v1888 = vand.u32 %v1162, 4294901760
        %1889 = vmatpush.msra.mxu0 %v1888
        %v1890 = vand.u32 %v1161, 4294901760
        %1891 = vmatpush.msra.mxu0 %v1890
        %v1892 = vand.u32 %v1160, 4294901760
        %1893 = vmatpush.msra.mxu0 %v1892
        %v1894 = vand.u32 %v1159, 4294901760
        %1895 = vmatpush.msra.mxu0 %v1894
        %v1896 = vand.u32 %v1158, 4294901760
        %1897 = vmatpush.msra.mxu0 %v1896
        %v1898 = vand.u32 %v1157, 4294901760
        %1899 = vmatpush.msra.mxu0 %v1898
        %v1900 = vand.u32 %v1156, 4294901760
        %1901 = vmatpush.msra.mxu0 %v1900
        %v1902 = vand.u32 %v1155, 4294901760
        %1903 = vmatpush.msra.mxu0 %v1902
        %v1904 = vand.u32 %v1154, 4294901760
        %1905 = vmatpush.msra.mxu0 %v1904
        %v1906 = vand.u32 %v1153, 4294901760
        %1907 = vmatpush.msra.mxu0 %v1906
        %v1908 = vand.u32 %v1152, 4294901760
        %1909 = vmatpush.msra.mxu0 %v1908
        %v1910 = vand.u32 %v1151, 4294901760
        %1911 = vmatpush.msra.mxu0 %v1910
        %v1912 = vand.u32 %v1150, 4294901760
        %1913 = vmatpush.msra.mxu0 %v1912
        %v1914 = vand.u32 %v1149, 4294901760
        %1915 = vmatpush.msra.mxu0 %v1914
        %v1916 = vand.u32 %v1148, 4294901760
        %1917 = vmatpush.msra.mxu0 %v1916
        %v1918 = vand.u32 %v1146, 4294901760
        %1919 = vmatmul.f32.gmra.mxu0 %v1918
        %v1920 = vpop.f32.mrf.mxu0
        %v1921 = vadd.f32 %v1880, %v1920
        %v1922 = vand.u32 %v1147, 4294901760
        %1923 = vmatmul.f32.gmra.mxu0 %v1922
        %v1924 = vpop.f32.mrf.mxu0
        %v1925 = vadd.f32 %v1884, %v1924
        %1926 = vdwg.mxu0
        %v1927 = vld [vmem:[#allocation3 + $0x4] sm:$0xff]
        %v1928 = vld [vmem:[#allocation3 + $0xc] sm:$0xff]
        %s1929 = scalar_lea.vmem [#allocation9], 256
        %v1930 = vld [vmem:[%s1929] sm:$0xff]
        %v1931 = vld [vmem:[%s1929 + $0x8] sm:$0xff]
        %v1932 = vld [vmem:[%s1929 + $0x10] sm:$0xff]
        %v1933 = vld [vmem:[%s1929 + $0x18] sm:$0xff]
        %v1934 = vld [vmem:[%s1929 + $0x20] sm:$0xff]
        %v1935 = vld [vmem:[%s1929 + $0x28] sm:$0xff]
        %v1936 = vld [vmem:[%s1929 + $0x30] sm:$0xff]
        %v1937 = vld [vmem:[%s1929 + $0x38] sm:$0xff]
        %v1938 = vld [vmem:[%s1929 + $0x40] sm:$0xff]
        %v1939 = vld [vmem:[%s1929 + $0x48] sm:$0xff]
        %v1940 = vld [vmem:[%s1929 + $0x50] sm:$0xff]
        %v1941 = vld [vmem:[%s1929 + $0x58] sm:$0xff]
        %v1942 = vld [vmem:[%s1929 + $0x60] sm:$0xff]
        %v1943 = vld [vmem:[%s1929 + $0x68] sm:$0xff]
        %v1944 = vld [vmem:[%s1929 + $0x70] sm:$0xff]
        %v1945 = vld [vmem:[%s1929 + $0x78] sm:$0xff]
        %v1946 = vand.u32 %v1945, 4294901760
        %1947 = vmatpush.msra.mxu0 %v1946
        %v1948 = vand.u32 %v1944, 4294901760
        %1949 = vmatpush.msra.mxu0 %v1948
        %v1950 = vand.u32 %v1943, 4294901760
        %1951 = vmatpush.msra.mxu0 %v1950
        %v1952 = vand.u32 %v1942, 4294901760
        %1953 = vmatpush.msra.mxu0 %v1952
        %v1954 = vand.u32 %v1941, 4294901760
        %1955 = vmatpush.msra.mxu0 %v1954
        %v1956 = vand.u32 %v1940, 4294901760
        %1957 = vmatpush.msra.mxu0 %v1956
        %v1958 = vand.u32 %v1939, 4294901760
        %1959 = vmatpush.msra.mxu0 %v1958
        %v1960 = vand.u32 %v1938, 4294901760
        %1961 = vmatpush.msra.mxu0 %v1960
        %v1962 = vand.u32 %v1937, 4294901760
        %1963 = vmatpush.msra.mxu0 %v1962
        %v1964 = vand.u32 %v1936, 4294901760
        %1965 = vmatpush.msra.mxu0 %v1964
        %v1966 = vand.u32 %v1935, 4294901760
        %1967 = vmatpush.msra.mxu0 %v1966
        %v1968 = vand.u32 %v1934, 4294901760
        %1969 = vmatpush.msra.mxu0 %v1968
        %v1970 = vand.u32 %v1933, 4294901760
        %1971 = vmatpush.msra.mxu0 %v1970
        %v1972 = vand.u32 %v1932, 4294901760
        %1973 = vmatpush.msra.mxu0 %v1972
        %v1974 = vand.u32 %v1931, 4294901760
        %1975 = vmatpush.msra.mxu0 %v1974
        %v1976 = vand.u32 %v1930, 4294901760
        %1977 = vmatpush.msra.mxu0 %v1976
        %v1978 = vand.u32 %v1927, 4294901760
        %v1979 = vsub.f32 %v1927, %v1978
        %v1980 = vand.u32 %v1979, 4294901760
        %v1981 = vsub.f32 %v1979, %v1980
        %v1982 = vand.u32 %v1981, 4294901760
        %1983 = vmatmul.f32.gmra.mxu0 %v1982
        %v1984 = vpop.f32.mrf.mxu0
        %v1985 = vadd.f32 0.0, %v1984
        %v1986 = vand.u32 %v1928, 4294901760
        %v1987 = vsub.f32 %v1928, %v1986
        %v1988 = vand.u32 %v1987, 4294901760
        %v1989 = vsub.f32 %v1987, %v1988
        %v1990 = vand.u32 %v1989, 4294901760
        %1991 = vmatmul.f32.gmra.mxu0 %v1990
        %v1992 = vpop.f32.mrf.mxu0
        %v1993 = vadd.f32 0.0, %v1992
        %1994 = vdwg.mxu0
        %v1995 = vand.u32 %v1945, 4294901760
        %v1996 = vsub.f32 %v1945, %v1995
        %v1997 = vand.u32 %v1996, 4294901760
        %v1998 = vsub.f32 %v1996, %v1997
        %v1999 = vand.u32 %v1998, 4294901760
        %2000 = vmatpush.msra.mxu0 %v1999
        %v2001 = vand.u32 %v1944, 4294901760
        %v2002 = vsub.f32 %v1944, %v2001
        %v2003 = vand.u32 %v2002, 4294901760
        %v2004 = vsub.f32 %v2002, %v2003
        %v2005 = vand.u32 %v2004, 4294901760
        %2006 = vmatpush.msra.mxu0 %v2005
        %v2007 = vand.u32 %v1943, 4294901760
        %v2008 = vsub.f32 %v1943, %v2007
        %v2009 = vand.u32 %v2008, 4294901760
        %v2010 = vsub.f32 %v2008, %v2009
        %v2011 = vand.u32 %v2010, 4294901760
        %2012 = vmatpush.msra.mxu0 %v2011
        %v2013 = vand.u32 %v1942, 4294901760
        %v2014 = vsub.f32 %v1942, %v2013
        %v2015 = vand.u32 %v2014, 4294901760
        %v2016 = vsub.f32 %v2014, %v2015
        %v2017 = vand.u32 %v2016, 4294901760
        %2018 = vmatpush.msra.mxu0 %v2017
        %v2019 = vand.u32 %v1941, 4294901760
        %v2020 = vsub.f32 %v1941, %v2019
        %v2021 = vand.u32 %v2020, 4294901760
        %v2022 = vsub.f32 %v2020, %v2021
        %v2023 = vand.u32 %v2022, 4294901760
        %2024 = vmatpush.msra.mxu0 %v2023
        %v2025 = vand.u32 %v1940, 4294901760
        %v2026 = vsub.f32 %v1940, %v2025
        %v2027 = vand.u32 %v2026, 4294901760
        %v2028 = vsub.f32 %v2026, %v2027
        %v2029 = vand.u32 %v2028, 4294901760
        %2030 = vmatpush.msra.mxu0 %v2029
        %v2031 = vand.u32 %v1939, 4294901760
        %v2032 = vsub.f32 %v1939, %v2031
        %v2033 = vand.u32 %v2032, 4294901760
        %v2034 = vsub.f32 %v2032, %v2033
        %v2035 = vand.u32 %v2034, 4294901760
        %2036 = vmatpush.msra.mxu0 %v2035
        %v2037 = vand.u32 %v1938, 4294901760
        %v2038 = vsub.f32 %v1938, %v2037
        %v2039 = vand.u32 %v2038, 4294901760
        %v2040 = vsub.f32 %v2038, %v2039
        %v2041 = vand.u32 %v2040, 4294901760
        %2042 = vmatpush.msra.mxu0 %v2041
        %v2043 = vand.u32 %v1937, 4294901760
        %v2044 = vsub.f32 %v1937, %v2043
        %v2045 = vand.u32 %v2044, 4294901760
        %v2046 = vsub.f32 %v2044, %v2045
        %v2047 = vand.u32 %v2046, 4294901760
        %2048 = vmatpush.msra.mxu0 %v2047
        %v2049 = vand.u32 %v1936, 4294901760
        %v2050 = vsub.f32 %v1936, %v2049
        %v2051 = vand.u32 %v2050, 4294901760
        %v2052 = vsub.f32 %v2050, %v2051
        %v2053 = vand.u32 %v2052, 4294901760
        %2054 = vmatpush.msra.mxu0 %v2053
        %v2055 = vand.u32 %v1935, 4294901760
        %v2056 = vsub.f32 %v1935, %v2055
        %v2057 = vand.u32 %v2056, 4294901760
        %v2058 = vsub.f32 %v2056, %v2057
        %v2059 = vand.u32 %v2058, 4294901760
        %2060 = vmatpush.msra.mxu0 %v2059
        %v2061 = vand.u32 %v1934, 4294901760
        %v2062 = vsub.f32 %v1934, %v2061
        %v2063 = vand.u32 %v2062, 4294901760
        %v2064 = vsub.f32 %v2062, %v2063
        %v2065 = vand.u32 %v2064, 4294901760
        %2066 = vmatpush.msra.mxu0 %v2065
        %v2067 = vand.u32 %v1933, 4294901760
        %v2068 = vsub.f32 %v1933, %v2067
        %v2069 = vand.u32 %v2068, 4294901760
        %v2070 = vsub.f32 %v2068, %v2069
        %v2071 = vand.u32 %v2070, 4294901760
        %2072 = vmatpush.msra.mxu0 %v2071
        %v2073 = vand.u32 %v1932, 4294901760
        %v2074 = vsub.f32 %v1932, %v2073
        %v2075 = vand.u32 %v2074, 4294901760
        %v2076 = vsub.f32 %v2074, %v2075
        %v2077 = vand.u32 %v2076, 4294901760
        %2078 = vmatpush.msra.mxu0 %v2077
        %v2079 = vand.u32 %v1931, 4294901760
        %v2080 = vsub.f32 %v1931, %v2079
        %v2081 = vand.u32 %v2080, 4294901760
        %v2082 = vsub.f32 %v2080, %v2081
        %v2083 = vand.u32 %v2082, 4294901760
        %2084 = vmatpush.msra.mxu0 %v2083
        %v2085 = vand.u32 %v1930, 4294901760
        %v2086 = vsub.f32 %v1930, %v2085
        %v2087 = vand.u32 %v2086, 4294901760
        %v2088 = vsub.f32 %v2086, %v2087
        %v2089 = vand.u32 %v2088, 4294901760
        %2090 = vmatpush.msra.mxu0 %v2089
        %v2091 = vand.u32 %v1927, 4294901760
        %2092 = vmatmul.f32.gmra.mxu0 %v2091
        %v2093 = vpop.f32.mrf.mxu0
        %v2094 = vadd.f32 %v1985, %v2093
        %v2095 = vand.u32 %v1928, 4294901760
        %2096 = vmatmul.f32.gmra.mxu0 %v2095
        %v2097 = vpop.f32.mrf.mxu0
        %v2098 = vadd.f32 %v1993, %v2097
        %2099 = vdwg.mxu0
        %v2100 = vand.u32 %v1945, 4294901760
        %v2101 = vsub.f32 %v1945, %v2100
        %2102 = vmatpush.msra.mxu0 %v2101
        %v2103 = vand.u32 %v1944, 4294901760
        %v2104 = vsub.f32 %v1944, %v2103
        %2105 = vmatpush.msra.mxu0 %v2104
        %v2106 = vand.u32 %v1943, 4294901760
        %v2107 = vsub.f32 %v1943, %v2106
        %2108 = vmatpush.msra.mxu0 %v2107
        %v2109 = vand.u32 %v1942, 4294901760
        %v2110 = vsub.f32 %v1942, %v2109
        %2111 = vmatpush.msra.mxu0 %v2110
        %v2112 = vand.u32 %v1941, 4294901760
        %v2113 = vsub.f32 %v1941, %v2112
        %2114 = vmatpush.msra.mxu0 %v2113
        %v2115 = vand.u32 %v1940, 4294901760
        %v2116 = vsub.f32 %v1940, %v2115
        %2117 = vmatpush.msra.mxu0 %v2116
        %v2118 = vand.u32 %v1939, 4294901760
        %v2119 = vsub.f32 %v1939, %v2118
        %2120 = vmatpush.msra.mxu0 %v2119
        %v2121 = vand.u32 %v1938, 4294901760
        %v2122 = vsub.f32 %v1938, %v2121
        %2123 = vmatpush.msra.mxu0 %v2122
        %v2124 = vand.u32 %v1937, 4294901760
        %v2125 = vsub.f32 %v1937, %v2124
        %2126 = vmatpush.msra.mxu0 %v2125
        %v2127 = vand.u32 %v1936, 4294901760
        %v2128 = vsub.f32 %v1936, %v2127
        %2129 = vmatpush.msra.mxu0 %v2128
        %v2130 = vand.u32 %v1935, 4294901760
        %v2131 = vsub.f32 %v1935, %v2130
        %2132 = vmatpush.msra.mxu0 %v2131
        %v2133 = vand.u32 %v1934, 4294901760
        %v2134 = vsub.f32 %v1934, %v2133
        %2135 = vmatpush.msra.mxu0 %v2134
        %v2136 = vand.u32 %v1933, 4294901760
        %v2137 = vsub.f32 %v1933, %v2136
        %2138 = vmatpush.msra.mxu0 %v2137
        %v2139 = vand.u32 %v1932, 4294901760
        %v2140 = vsub.f32 %v1932, %v2139
        %2141 = vmatpush.msra.mxu0 %v2140
        %v2142 = vand.u32 %v1931, 4294901760
        %v2143 = vsub.f32 %v1931, %v2142
        %2144 = vmatpush.msra.mxu0 %v2143
        %v2145 = vand.u32 %v1930, 4294901760
        %v2146 = vsub.f32 %v1930, %v2145
        %2147 = vmatpush.msra.mxu0 %v2146
        %v2148 = vand.u32 %v1927, 4294901760
        %v2149 = vsub.f32 %v1927, %v2148
        %2150 = vmatmul.f32.gmra.mxu0 %v2149
        %v2151 = vpop.f32.mrf.mxu0
        %v2152 = vadd.f32 %v2094, %v2151
        %v2153 = vand.u32 %v1928, 4294901760
        %v2154 = vsub.f32 %v1928, %v2153
        %2155 = vmatmul.f32.gmra.mxu0 %v2154
        %v2156 = vpop.f32.mrf.mxu0
        %v2157 = vadd.f32 %v2098, %v2156
        %2158 = vdwg.mxu0
        %v2159 = vand.u32 %v1945, 4294901760
        %2160 = vmatpush.msra.mxu0 %v2159
        %v2161 = vand.u32 %v1944, 4294901760
        %2162 = vmatpush.msra.mxu0 %v2161
        %v2163 = vand.u32 %v1943, 4294901760
        %2164 = vmatpush.msra.mxu0 %v2163
        %v2165 = vand.u32 %v1942, 4294901760
        %2166 = vmatpush.msra.mxu0 %v2165
        %v2167 = vand.u32 %v1941, 4294901760
        %2168 = vmatpush.msra.mxu0 %v2167
        %v2169 = vand.u32 %v1940, 4294901760
        %2170 = vmatpush.msra.mxu0 %v2169
        %v2171 = vand.u32 %v1939, 4294901760
        %2172 = vmatpush.msra.mxu0 %v2171
        %v2173 = vand.u32 %v1938, 4294901760
        %2174 = vmatpush.msra.mxu0 %v2173
        %v2175 = vand.u32 %v1937, 4294901760
        %2176 = vmatpush.msra.mxu0 %v2175
        %v2177 = vand.u32 %v1936, 4294901760
        %2178 = vmatpush.msra.mxu0 %v2177
        %v2179 = vand.u32 %v1935, 4294901760
        %2180 = vmatpush.msra.mxu0 %v2179
        %v2181 = vand.u32 %v1934, 4294901760
        %2182 = vmatpush.msra.mxu0 %v2181
        %v2183 = vand.u32 %v1933, 4294901760
        %2184 = vmatpush.msra.mxu0 %v2183
        %v2185 = vand.u32 %v1932, 4294901760
        %2186 = vmatpush.msra.mxu0 %v2185
        %v2187 = vand.u32 %v1931, 4294901760
        %2188 = vmatpush.msra.mxu0 %v2187
        %v2189 = vand.u32 %v1930, 4294901760
        %2190 = vmatpush.msra.mxu0 %v2189
        %v2191 = vand.u32 %v1927, 4294901760
        %v2192 = vsub.f32 %v1927, %v2191
        %v2193 = vand.u32 %v2192, 4294901760
        %2194 = vmatmul.f32.gmra.mxu0 %v2193
        %v2195 = vpop.f32.mrf.mxu0
        %v2196 = vadd.f32 %v2152, %v2195
        %v2197 = vand.u32 %v1928, 4294901760
        %v2198 = vsub.f32 %v1928, %v2197
        %v2199 = vand.u32 %v2198, 4294901760
        %2200 = vmatmul.f32.gmra.mxu0 %v2199
        %v2201 = vpop.f32.mrf.mxu0
        %v2202 = vadd.f32 %v2157, %v2201
        %2203 = vdwg.mxu0
        %v2204 = vand.u32 %v1945, 4294901760
        %v2205 = vsub.f32 %v1945, %v2204
        %v2206 = vand.u32 %v2205, 4294901760
        %2207 = vmatpush.msra.mxu0 %v2206
        %v2208 = vand.u32 %v1944, 4294901760
        %v2209 = vsub.f32 %v1944, %v2208
        %v2210 = vand.u32 %v2209, 4294901760
        %2211 = vmatpush.msra.mxu0 %v2210
        %v2212 = vand.u32 %v1943, 4294901760
        %v2213 = vsub.f32 %v1943, %v2212
        %v2214 = vand.u32 %v2213, 4294901760
        %2215 = vmatpush.msra.mxu0 %v2214
        %v2216 = vand.u32 %v1942, 4294901760
        %v2217 = vsub.f32 %v1942, %v2216
        %v2218 = vand.u32 %v2217, 4294901760
        %2219 = vmatpush.msra.mxu0 %v2218
        %v2220 = vand.u32 %v1941, 4294901760
        %v2221 = vsub.f32 %v1941, %v2220
        %v2222 = vand.u32 %v2221, 4294901760
        %2223 = vmatpush.msra.mxu0 %v2222
        %v2224 = vand.u32 %v1940, 4294901760
        %v2225 = vsub.f32 %v1940, %v2224
        %v2226 = vand.u32 %v2225, 4294901760
        %2227 = vmatpush.msra.mxu0 %v2226
        %v2228 = vand.u32 %v1939, 4294901760
        %v2229 = vsub.f32 %v1939, %v2228
        %v2230 = vand.u32 %v2229, 4294901760
        %2231 = vmatpush.msra.mxu0 %v2230
        %v2232 = vand.u32 %v1938, 4294901760
        %v2233 = vsub.f32 %v1938, %v2232
        %v2234 = vand.u32 %v2233, 4294901760
        %2235 = vmatpush.msra.mxu0 %v2234
        %v2236 = vand.u32 %v1937, 4294901760
        %v2237 = vsub.f32 %v1937, %v2236
        %v2238 = vand.u32 %v2237, 4294901760
        %2239 = vmatpush.msra.mxu0 %v2238
        %v2240 = vand.u32 %v1936, 4294901760
        %v2241 = vsub.f32 %v1936, %v2240
        %v2242 = vand.u32 %v2241, 4294901760
        %2243 = vmatpush.msra.mxu0 %v2242
        %v2244 = vand.u32 %v1935, 4294901760
        %v2245 = vsub.f32 %v1935, %v2244
        %v2246 = vand.u32 %v2245, 4294901760
        %2247 = vmatpush.msra.mxu0 %v2246
        %v2248 = vand.u32 %v1934, 4294901760
        %v2249 = vsub.f32 %v1934, %v2248
        %v2250 = vand.u32 %v2249, 4294901760
        %2251 = vmatpush.msra.mxu0 %v2250
        %v2252 = vand.u32 %v1933, 4294901760
        %v2253 = vsub.f32 %v1933, %v2252
        %v2254 = vand.u32 %v2253, 4294901760
        %2255 = vmatpush.msra.mxu0 %v2254
        %v2256 = vand.u32 %v1932, 4294901760
        %v2257 = vsub.f32 %v1932, %v2256
        %v2258 = vand.u32 %v2257, 4294901760
        %2259 = vmatpush.msra.mxu0 %v2258
        %v2260 = vand.u32 %v1931, 4294901760
        %v2261 = vsub.f32 %v1931, %v2260
        %v2262 = vand.u32 %v2261, 4294901760
        %2263 = vmatpush.msra.mxu0 %v2262
        %v2264 = vand.u32 %v1930, 4294901760
        %v2265 = vsub.f32 %v1930, %v2264
        %v2266 = vand.u32 %v2265, 4294901760
        %2267 = vmatpush.msra.mxu0 %v2266
        %v2268 = vand.u32 %v1927, 4294901760
        %2269 = vmatmul.f32.gmra.mxu0 %v2268
        %v2270 = vpop.f32.mrf.mxu0
        %v2271 = vadd.f32 %v2196, %v2270
        %v2272 = vand.u32 %v1928, 4294901760
        %2273 = vmatmul.f32.gmra.mxu0 %v2272
        %v2274 = vpop.f32.mrf.mxu0
        %v2275 = vadd.f32 %v2202, %v2274
        %2276 = vdwg.mxu0
        %v2277 = vand.u32 %v1945, 4294901760
        %2278 = vmatpush.msra.mxu0 %v2277
        %v2279 = vand.u32 %v1944, 4294901760
        %2280 = vmatpush.msra.mxu0 %v2279
        %v2281 = vand.u32 %v1943, 4294901760
        %2282 = vmatpush.msra.mxu0 %v2281
        %v2283 = vand.u32 %v1942, 4294901760
        %2284 = vmatpush.msra.mxu0 %v2283
        %v2285 = vand.u32 %v1941, 4294901760
        %2286 = vmatpush.msra.mxu0 %v2285
        %v2287 = vand.u32 %v1940, 4294901760
        %2288 = vmatpush.msra.mxu0 %v2287
        %v2289 = vand.u32 %v1939, 4294901760
        %2290 = vmatpush.msra.mxu0 %v2289
        %v2291 = vand.u32 %v1938, 4294901760
        %2292 = vmatpush.msra.mxu0 %v2291
        %v2293 = vand.u32 %v1937, 4294901760
        %2294 = vmatpush.msra.mxu0 %v2293
        %v2295 = vand.u32 %v1936, 4294901760
        %2296 = vmatpush.msra.mxu0 %v2295
        %v2297 = vand.u32 %v1935, 4294901760
        %2298 = vmatpush.msra.mxu0 %v2297
        %v2299 = vand.u32 %v1934, 4294901760
        %2300 = vmatpush.msra.mxu0 %v2299
        %v2301 = vand.u32 %v1933, 4294901760
        %2302 = vmatpush.msra.mxu0 %v2301
        %v2303 = vand.u32 %v1932, 4294901760
        %2304 = vmatpush.msra.mxu0 %v2303
        %v2305 = vand.u32 %v1931, 4294901760
        %2306 = vmatpush.msra.mxu0 %v2305
        %v2307 = vand.u32 %v1930, 4294901760
        %2308 = vmatpush.msra.mxu0 %v2307
        %v2309 = vand.u32 %v1927, 4294901760
        %2310 = vmatmul.f32.gmra.mxu0 %v2309
        %v2311 = vpop.f32.mrf.mxu0
        %v2312 = vadd.f32 %v2271, %v2311
        %v2313 = vand.u32 %v1928, 4294901760
        %2314 = vmatmul.f32.gmra.mxu0 %v2313
        %v2315 = vpop.f32.mrf.mxu0
        %v2316 = vadd.f32 %v2275, %v2315
        %2317 = vdwg.mxu0
        %v2318 = vadd.f32 %v1921, %v2312
        %v2319 = vadd.f32 %v1925, %v2316
        %v2320 = vperm.slane %v266, 3
        %v2321 = vadd.f32 %v2318, %v2320
        %v2322 = vadd.f32 %v2319, %v2320
        %v2323 = vmax.f32 %v2321, 0.0
        %v2324 = vmax.f32 %v2322, 0.0
        %v2325 = vperm.slane %v266, 4
        %v2326 = vmul.f32 %v2323, %v2325
        %v2327 = vmul.f32 %v2324, %v2325
        %v2328 = vperm.slane %v266, 5
        %v2329 = vadd.f32 %v2326, %v2328
        %v2330 = vadd.f32 %v2327, %v2328
        %2331 = vst [vmem:[%s265] sm:$0xff] %v2329
        %2332 = vst [vmem:[%s265 + $0x8] sm:$0xff] %v2330
        %s2333 = sand.u32 %s120, 1
        %s2334 = scalar_lea.sflag [#allocation6], %s2333
        %s2335 = sand.u32 %s120, 1
        %s2336 = smul.addr %s2335, 16
        %s2337 = scalar_lea.vmem [#allocation12], %s2336
        // Predicated region
        $region53: #{tpu_custom_call.1} parent=35 // pred_check
          %p2338 = pneg %p130
        $region54: #{tpu_custom_call.1} parent=35 // pred_check_branch
          %2340 = sbr.rel (%p2338) target = $region56
        $region55: #{tpu_custom_call.1} parent=35 // pred_region
          %2342 = vsyncadd %s2334, 0
          %s2343 = smul.addr %s23, 2
          %s2344 = smul.addr %s2343, 8
          %s2345 = scalar_lea.hbm %s4, %s2344
          %s2346 = sshll.u32 %s2337, 4
          %s2347 = int_to_ptr.vmem [resolvable:$true] %s2346
          %s2348 = sshll.u32 %s2345, 4
          %s2349 = int_to_ptr.hbm [resolvable:$true] %s2348
          %2354 = dma.vmem_to_hbm [thread:$0]  %s2347, 256, %s2349, %s2334, 128, 128, 8
        $region56: #{tpu_custom_call.1} parent=35 // pred_fallthru
          _
      $region36: #{tpu_custom_call.1} parent=5 // pred_fallthru
        _
      %p2355 = scmp.le.s32.totalorder 2, %s18
      // Predicated region
      $region57: #{tpu_custom_call.1} parent=5 // pred_check
        %p2356 = pneg %p2355
      $region58: #{tpu_custom_call.1} parent=5 // pred_check_branch
        %2358 = sbr.rel (%p2356) target = $region60
      $region59: #{tpu_custom_call.1} parent=5 // pred_region
        %s2359 = ssub.s32 %s18, 2
        // Predicated region
        $region61: #{tpu_custom_call.1} parent=59 // pred_check
          %p2360 = pneg %p136
        $region62: #{tpu_custom_call.1} parent=59 // pred_check_branch
          %2362 = sbr.rel (%p2360) target = $region64
        $region63: #{tpu_custom_call.1} parent=59 // pred_region
          %s2363 = sand.u32 %s121, 1
          %s2364 = scalar_lea.sflag [#allocation6], %s2363
          %s2365 = sand.u32 %s121, 1
          %s2366 = smul.addr %s2365, 16
          %s2367 = scalar_lea.vmem [#allocation12], %s2366
          %2369 = dma.done %s2364, 256
        $region64: #{tpu_custom_call.1} parent=59 // pred_fallthru
          _
      $region60: #{tpu_custom_call.1} parent=5 // pred_fallthru
        _
    $region6: #{tpu_custom_call.1} parent=1 // loop_footer
      %s22 = sadd.s32 1, %s18
    $region7: #{tpu_custom_call.1} parent=1 // loop_footer_branch
      %17 = sbr.rel target = $region3
    $region8: #{tpu_custom_call.1} parent=1 // loop_exit
      _
    %2370 = vsyncpa [#allocation5], 1
    %s2371 = scalar_lea.sflag [#allocation5], 1
    %2372 = vsyncpa %s2371, 1
    %2373 = vsyncpa [#allocation8], 1
    %2374 = vsyncpa [#allocation11], 1
    %2375 = vsyncpa [#allocation6], 1
    %s2376 = scalar_lea.sflag [#allocation6], 1
    %2377 = vsyncpa %s2376, 1

</llo_original>
